<compile_context>
chip_gen: v6e
topology: v6e:2x2x1
jax: 0.10.0
libtpu: 0.0.40
codegen_flags: <defaults>
</compile_context>

<pallas_src>
import jax
import jax.numpy as jnp
import numpy as np
from jax.experimental import pallas as pl
from jax.experimental.pallas import tpu as pltpu

IN_DIM = 50 * 52           # 2600
IN_PAD = 2688              # 21 * 128 (zero padded)
H1 = 128
H2 = 128
V1 = 64
A1 = 256
N_ROWS = 10
N_COLS = 10
N_ACT = N_ROWS * N_COLS    # 100
HEAD_FUSED = 2 * V1 + A1   # 384 = [wv1 | pad | wa1]
VALUE_LANE = 100           # lane of the fused output row that carries the value


def _softplus(x):
    # matches torch.nn.Softplus(beta=1, threshold=20)
    return jnp.where(x > 20.0, x, jnp.log1p(jnp.exp(jnp.minimum(x, 20.0))))


def _sigmoid(x):
    return 1.0 / (1.0 + jnp.exp(-x))


def energy_latency_kernel(x_ref, w1_ref, w2a2_ref, wva_ref, bias_ref, out_ref):
    # constant row: [b1 | b2 | bva(384) | ba2_pad | wv2^T_pad | bv2_pad]  (1,1024) f32
    bias = bias_ref[...]
    b1 = bias[:, 0:128]
    b2 = bias[:, 128:256]
    bva = bias[:, 256:640]
    ba2 = bias[:, 640:768]
    wv2 = bias[:, 768:768 + V1]          # (1, 64) transposed value-head weight
    bv2 = bias[:, 896:897]               # (1, 1)

    x = x_ref[...]                       # (1, 2688) bf16

    # ---- feature trunk: Linear -> Softplus -> Linear -> Softplus (f32 acts) ----
    h = jnp.dot(x, w1_ref[...], preferred_element_type=jnp.float32) + b1
    h = _softplus(h)                                                  # (1, 128)
    h = jnp.dot(h.astype(jnp.bfloat16), w2a2_ref[:H2, :],
                preferred_element_type=jnp.float32) + b2
    h = _softplus(h)                                                  # (1, 128)

    # ---- fused first layer of value + action heads: one (1,128)@(128,384) dot ----
    hv = jnp.dot(h.astype(jnp.bfloat16), wva_ref[...],
                 preferred_element_type=jnp.float32) + bva            # (1, 384)

    # ---- value head: Tanhshrink -> (VPU mul + lane reduce) -> Sigmoid ----
    v = hv[:, :V1]                                                    # (1, 64)
    v = v - jnp.tanh(v)                                               # Tanhshrink
    value = _sigmoid(jnp.sum(v * wv2, axis=-1, keepdims=True) + bv2)  # (1, 1)

    # ---- action head: Softplus -> one (1,256)@(256,128) matmul (padded logits) ----
    a = _softplus(hv[:, 2 * V1:])                                     # (1, 256)
    logits = jnp.dot(a.astype(jnp.bfloat16), w2a2_ref[H2:, :],
                     preferred_element_type=jnp.float32) + ba2        # (1, 128)

    # ---- single lane-dense fused store: lanes [0,100)=logits, lane 100=value ----
    lane = jax.lax.broadcasted_iota(jnp.int32, (1, 128), 1)
    out_ref[...] = jnp.where(lane == VALUE_LANE, value, logits)


def _vmem_spec():
    return pl.BlockSpec(memory_space=pltpu.MemorySpace.VMEM)


def prepare_params(params):
    """One-time weight prep: pad / fuse / stack / transpose / cast to bf16."""
    (w1, b1, w2, b2, wv1, bv1, wv2, bv2, wa1, ba1, wa2, ba2) = params

    # pad K of the big matmul to a lane multiple (zero rows -> no effect)
    w1p = jnp.pad(w1, ((0, IN_PAD - IN_DIM), (0, 0))).astype(jnp.bfloat16)

    # row-stack w2 (128,128) over wa2 zero-padded to (256,128) -> one (384,128) buffer
    wa2_pad = jnp.pad(wa2, ((0, 0), (0, 128 - N_ACT)))
    w2a2 = jnp.concatenate([w2, wa2_pad], axis=0).astype(jnp.bfloat16)      # (384,128)

    # fuse the two head-input layers: [wv1 | 64 zero cols | wa1] -> (128, 384)
    wva = jnp.concatenate(
        [wv1, jnp.zeros((H2, 128 - V1), jnp.float32), wa1], axis=1).astype(jnp.bfloat16)

    # one f32 constant row (1,1024): biases + transposed wv2 + bv2
    bva = jnp.concatenate([bv1, jnp.zeros((128 - V1,), jnp.float32), ba1])  # (384,)
    ba2_pad = jnp.pad(ba2, (0, 128 - N_ACT))                                # (128,)
    wv2_row = jnp.pad(wv2.reshape(-1), (0, 128 - V1))                       # (128,)
    bv2_blk = jnp.pad(bv2.reshape(1), (0, 127))                             # (128,)
    bias = jnp.concatenate([b1, b2, bva, ba2_pad, wv2_row, bv2_blk]).reshape(1, 1024)
    bias = bias.astype(jnp.float32)

    return (w1p, w2a2, wva, bias)


def energy_latency_forward(x, prepared):
    """x: any float array with 2600 elements. Returns (value (1,), action (10,10))."""
    # NOTE: x is cast to bf16 to keep the dominant matmul on the fast bf16 MXU path;
    # covered by the matched reference / tolerances below.
    x_row = jnp.pad(x.reshape(1, IN_DIM).astype(jnp.float32),
                    ((0, 0), (0, IN_PAD - IN_DIM))).astype(jnp.bfloat16)

    cost = pl.CostEstimate(flops=884_864, transcendentals=1_200,
                           bytes_accessed=895_000)

    out = pl.pallas_call(
        energy_latency_kernel,
        out_shape=jax.ShapeDtypeStruct((1, 128), jnp.float32),
        in_specs=[_vmem_spec() for _ in range(1 + len(prepared))],
        out_specs=_vmem_spec(),
        cost_estimate=cost,
    )(x_row, *prepared)

    value = out[0, VALUE_LANE:VALUE_LANE + 1]                     # (1,)
    logits = out[0, :N_ACT].reshape(N_ROWS, N_COLS)               # (10,10)
    action = jax.nn.softmax(logits, axis=1)                       # 100-elem epilogue
    return value, action


def init_params(key):
    """Deterministic init (uniform +-1/sqrt(fan_in), like PyTorch Linear default)."""
    def linear(k, fan_in, fan_out):
        kw, kb = jax.random.split(k)
        bound = 1.0 / np.sqrt(fan_in)
        w = jax.random.uniform(kw, (fan_in, fan_out), jnp.float32, -bound, bound)
        b = jax.random.uniform(kb, (fan_out,), jnp.float32, -bound, bound)
        return w, b

    keys = jax.random.split(key, 6)
    w1, b1 = linear(keys[0], IN_DIM, H1)
    w2, b2 = linear(keys[1], H1, H2)
    wv1, bv1 = linear(keys[2], H2, V1)
    wv2, bv2 = linear(keys[3], V1, 1)
    wa1, ba1 = linear(keys[4], H2, A1)
    wa2, ba2 = linear(keys[5], A1, N_ACT)
    return (w1, b1, w2, b2, wv1, bv1, wv2, bv2, wa1, ba1, wa2, ba2)


def reference_forward_f32(x, params):
    """Pure f32 reference (torch module semantics)."""
    (w1, b1, w2, b2, wv1, bv1, wv2, bv2, wa1, ba1, wa2, ba2) = params
    xf = x.reshape(-1)
    h = jax.nn.softplus(xf @ w1 + b1)
    h = jax.nn.softplus(h @ w2 + b2)
    v = h @ wv1 + bv1
    v = v - jnp.tanh(v)
    v = jax.nn.sigmoid(v @ wv2 + bv2)
    a = jax.nn.softplus(h @ wa1 + ba1)
    a = (a @ wa2 + ba2).reshape(N_ROWS, N_COLS)
    a = jax.nn.softmax(a, axis=1)
    return v, a


def reference_forward_matched(x, params):
    """Reference that mirrors the kernel's bf16 matmul inputs / f32 accumulation."""
    (w1, b1, w2, b2, wv1, bv1, wv2, bv2, wa1, ba1, wa2, ba2) = params
    bf = lambda t: t.astype(jnp.bfloat16).astype(jnp.float32)
    xf = bf(x.reshape(1, -1))
    h = _softplus(xf @ bf(w1) + b1)
    h = _softplus(bf(h) @ bf(w2) + b2)
    v = bf(h) @ bf(wv1) + bv1
    v = v - jnp.tanh(v)
    v = _sigmoid(v @ wv2 + bv2)
    a = _softplus(bf(h) @ bf(wa1) + ba1)
    logits = (bf(a) @ bf(wa2) + ba2).reshape(N_ROWS, N_COLS)
    logits = logits - jnp.max(logits, axis=1, keepdims=True)
    e = jnp.exp(logits)
    return v.reshape(1), e / jnp.sum(e, axis=1, keepdims=True)


if __name__ == "__main__":
    key = jax.random.PRNGKey(0)
    k_x, k_p = jax.random.split(key)

    x = jax.random.normal(k_x, (50, 52), dtype=jnp.float32)   # flattens to 2600 features
    params = init_params(k_p)
    prepared = prepare_params(params)

    fwd = jax.jit(energy_latency_forward)
    value, action = fwd(x, prepared)
    jax.block_until_ready((value, action))

    assert value.shape == (1,) and action.shape == (10, 10)

    # tight check against a numerically matched (bf16-weight) reference
    v_m, a_m = reference_forward_matched(x, params)
    np.testing.assert_allclose(np.asarray(value), np.asarray(v_m), rtol=2e-3, atol=2e-3)
    np.testing.assert_allclose(np.asarray(action), np.asarray(a_m), rtol=2e-3, atol=2e-3)

    # loose check against the pure-f32 torch-semantics reference
    v_f, a_f = reference_forward_f32(x, params)
    np.testing.assert_allclose(np.asarray(value), np.asarray(v_f).reshape(1),
                               rtol=2e-2, atol=2e-2)
    np.testing.assert_allclose(np.asarray(action), np.asarray(a_f), rtol=2e-2, atol=2e-2)

    # softmax rows must sum to 1
    np.testing.assert_allclose(np.asarray(action).sum(axis=1), np.ones(10),
                               rtol=1e-5, atol=1e-5)

    print("KERNEL_OK")
</pallas_src>

<mosaic_0001>
module attributes {stable_mosaic.version = 11 : i64} {
  func.func @energy_latency_kernel(%arg0: memref<1x2688xbf16, #tpu.memory_space<vmem>>, %arg1: memref<2688x128xbf16, #tpu.memory_space<vmem>>, %arg2: memref<384x128xbf16, #tpu.memory_space<vmem>>, %arg3: memref<128x384xbf16, #tpu.memory_space<vmem>>, %arg4: memref<1x1024xf32, #tpu.memory_space<vmem>>, %arg5: memref<1x128xf32, #tpu.memory_space<vmem>>) attributes {dimension_semantics = [], scalar_prefetch = 0 : i64, scratch_operands = 0 : i64, tpu.core_type = #tpu.core_type<tc>} {
    %c0 = arith.constant 0 : index
    %c0_0 = arith.constant 0 : index
    %0 = vector.load %arg4[%c0, %c0_0] : memref<1x1024xf32, #tpu.memory_space<vmem>>, vector<1x1024xf32>
    %1 = vector.extract_strided_slice %0 {offsets = [0, 0], sizes = [1, 128], strides = [1, 1]} : vector<1x1024xf32> to vector<1x128xf32>
    %2 = vector.extract_strided_slice %0 {offsets = [0, 128], sizes = [1, 128], strides = [1, 1]} : vector<1x1024xf32> to vector<1x128xf32>
    %3 = vector.extract_strided_slice %0 {offsets = [0, 256], sizes = [1, 384], strides = [1, 1]} : vector<1x1024xf32> to vector<1x384xf32>
    %4 = vector.extract_strided_slice %0 {offsets = [0, 640], sizes = [1, 128], strides = [1, 1]} : vector<1x1024xf32> to vector<1x128xf32>
    %5 = vector.extract_strided_slice %0 {offsets = [0, 768], sizes = [1, 64], strides = [1, 1]} : vector<1x1024xf32> to vector<1x64xf32>
    %6 = vector.extract_strided_slice %0 {offsets = [0, 896], sizes = [1, 1], strides = [1, 1]} : vector<1x1024xf32> to vector<1x1xf32>
    %c0_1 = arith.constant 0 : index
    %c0_2 = arith.constant 0 : index
    %7 = vector.load %arg0[%c0_1, %c0_2] : memref<1x2688xbf16, #tpu.memory_space<vmem>>, vector<1x2688xbf16>
    %c0_3 = arith.constant 0 : index
    %c0_4 = arith.constant 0 : index
    %8 = vector.load %arg1[%c0_3, %c0_4] : memref<2688x128xbf16, #tpu.memory_space<vmem>>, vector<2688x128xbf16>
    %cst = arith.constant dense<0.000000e+00> : vector<1x128xf32>
    %9 = tpu.matmul %7, %8, %cst {dimension_numbers = #tpu.dot_dimension_numbers<[1], [0], [0], [1], [0, 0, 1, 1], [], []>} : vector<1x2688xbf16>, vector<2688x128xbf16>, vector<1x128xf32> -> vector<1x128xf32>
    %10 = arith.addf %9, %1 : vector<1x128xf32>
    %cst_5 = arith.constant 2.000000e+01 : f32
    %11 = vector.broadcast %cst_5 : f32 to vector<1x128xf32>
    %12 = arith.cmpf ogt, %10, %11 : vector<1x128xf32>
    %cst_6 = arith.constant 2.000000e+01 : f32
    %13 = vector.broadcast %cst_6 : f32 to vector<1x128xf32>
    %14 = arith.minimumf %10, %13 : vector<1x128xf32>
    %15 = math.exp %14 : vector<1x128xf32>
    %16 = math.log1p %15 : vector<1x128xf32>
    %17 = arith.select %12, %10, %16 : vector<1x128xi1>, vector<1x128xf32>
    %18 = arith.truncf %17 : vector<1x128xf32> to vector<1x128xbf16>
    %c0_7 = arith.constant 0 : index
    %c0_8 = arith.constant 0 : index
    %19 = vector.load %arg2[%c0_7, %c0_8] : memref<384x128xbf16, #tpu.memory_space<vmem>>, vector<128x128xbf16>
    %cst_9 = arith.constant dense<0.000000e+00> : vector<1x128xf32>
    %20 = tpu.matmul %18, %19, %cst_9 {dimension_numbers = #tpu.dot_dimension_numbers<[1], [0], [0], [1], [0, 0, 1, 1], [], []>} : vector<1x128xbf16>, vector<128x128xbf16>, vector<1x128xf32> -> vector<1x128xf32>
    %21 = arith.addf %20, %2 : vector<1x128xf32>
    %cst_10 = arith.constant 2.000000e+01 : f32
    %22 = vector.broadcast %cst_10 : f32 to vector<1x128xf32>
    %23 = arith.cmpf ogt, %21, %22 : vector<1x128xf32>
    %cst_11 = arith.constant 2.000000e+01 : f32
    %24 = vector.broadcast %cst_11 : f32 to vector<1x128xf32>
    %25 = arith.minimumf %21, %24 : vector<1x128xf32>
    %26 = math.exp %25 : vector<1x128xf32>
    %27 = math.log1p %26 : vector<1x128xf32>
    %28 = arith.select %23, %21, %27 : vector<1x128xi1>, vector<1x128xf32>
    %29 = arith.truncf %28 : vector<1x128xf32> to vector<1x128xbf16>
    %c0_12 = arith.constant 0 : index
    %c0_13 = arith.constant 0 : index
    %30 = vector.load %arg3[%c0_12, %c0_13] : memref<128x384xbf16, #tpu.memory_space<vmem>>, vector<128x384xbf16>
    %cst_14 = arith.constant dense<0.000000e+00> : vector<1x384xf32>
    %31 = tpu.matmul %29, %30, %cst_14 {dimension_numbers = #tpu.dot_dimension_numbers<[1], [0], [0], [1], [0, 0, 1, 1], [], []>} : vector<1x128xbf16>, vector<128x384xbf16>, vector<1x384xf32> -> vector<1x384xf32>
    %32 = arith.addf %31, %3 : vector<1x384xf32>
    %33 = vector.extract_strided_slice %32 {offsets = [0, 0], sizes = [1, 64], strides = [1, 1]} : vector<1x384xf32> to vector<1x64xf32>
    %34 = math.tanh %33 : vector<1x64xf32>
    %35 = arith.subf %33, %34 : vector<1x64xf32>
    %36 = arith.mulf %35, %5 : vector<1x64xf32>
    %cst_15 = arith.constant dense<0.000000e+00> : vector<1xf32>
    %37 = vector.multi_reduction <add>, %36, %cst_15 [1] : vector<1x64xf32> to vector<1xf32>
    %38 = vector.shape_cast %37 : vector<1xf32> to vector<1x1xf32>
    %39 = arith.addf %38, %6 : vector<1x1xf32>
    %cst_16 = arith.constant 0.000000e+00 : f32
    %40 = vector.broadcast %cst_16 : f32 to vector<1x1xf32>
    %41 = arith.subf %40, %39 : vector<1x1xf32>
    %42 = math.exp %41 : vector<1x1xf32>
    %cst_17 = arith.constant 1.000000e+00 : f32
    %43 = vector.broadcast %cst_17 : f32 to vector<1x1xf32>
    %44 = arith.addf %43, %42 : vector<1x1xf32>
    %cst_18 = arith.constant 1.000000e+00 : f32
    %45 = vector.broadcast %cst_18 : f32 to vector<1x1xf32>
    %46 = arith.divf %45, %44 : vector<1x1xf32>
    %47 = vector.extract_strided_slice %32 {offsets = [0, 128], sizes = [1, 256], strides = [1, 1]} : vector<1x384xf32> to vector<1x256xf32>
    %cst_19 = arith.constant 2.000000e+01 : f32
    %48 = vector.broadcast %cst_19 : f32 to vector<1x256xf32>
    %49 = arith.cmpf ogt, %47, %48 : vector<1x256xf32>
    %cst_20 = arith.constant 2.000000e+01 : f32
    %50 = vector.broadcast %cst_20 : f32 to vector<1x256xf32>
    %51 = arith.minimumf %47, %50 : vector<1x256xf32>
    %52 = math.exp %51 : vector<1x256xf32>
    %53 = math.log1p %52 : vector<1x256xf32>
    %54 = arith.select %49, %47, %53 : vector<1x256xi1>, vector<1x256xf32>
    %55 = arith.truncf %54 : vector<1x256xf32> to vector<1x256xbf16>
    %c128 = arith.constant 128 : index
    %c0_21 = arith.constant 0 : index
    %56 = vector.load %arg2[%c128, %c0_21] : memref<384x128xbf16, #tpu.memory_space<vmem>>, vector<256x128xbf16>
    %cst_22 = arith.constant dense<0.000000e+00> : vector<1x128xf32>
    %57 = tpu.matmul %55, %56, %cst_22 {dimension_numbers = #tpu.dot_dimension_numbers<[1], [0], [0], [1], [0, 0, 1, 1], [], []>} : vector<1x256xbf16>, vector<256x128xbf16>, vector<1x128xf32> -> vector<1x128xf32>
    %58 = arith.addf %57, %4 : vector<1x128xf32>
    %59 = tpu.iota {dimensions = array<i32: 1>} : vector<1x128xi32>
    %c100_i32 = arith.constant 100 : i32
    %60 = vector.broadcast %c100_i32 : i32 to vector<1x128xi32>
    %61 = arith.cmpi eq, %59, %60 : vector<1x128xi32>
    %62 = vector.shape_cast %46 : vector<1x1xf32> to vector<1x1xf32>
    %63 = vector.broadcast %62 : vector<1x1xf32> to vector<1x128xf32>
    %64 = arith.select %61, %63, %58 : vector<1x128xi1>, vector<1x128xf32>
    %c0_23 = arith.constant 0 : index
    %c0_24 = arith.constant 0 : index
    %65 = vector.load %arg5[%c0_23, %c0_24] : memref<1x128xf32, #tpu.memory_space<vmem>>, vector<1x128xf32>
    tpu.vector_store %arg5[%c0_23, %c0_24], %64 {strides = array<i32>} : memref<1x128xf32, #tpu.memory_space<vmem>>, vector<1x128xf32>,
    return
  }
}

</mosaic_0001>

<llo_original>
// kernel: squeeze.3
$region0: #{squeeze.3}
  %s0 = inlined_call_operand.vmem [shape: f32[100], index: 0, kind: input, shape index: {}]
  %s1 = inlined_call_operand.vmem [shape: f32[10,10], index: 1, kind: output, shape index: {}]
  $region1: #{squeeze.3} parent=0
    #allocation0 [shape = 'u8[4096]{0}', space=vmem, size = 0x1000, scoped, tag = 'scoped mem for input reshape']
    %s3 = sshll.u32 1, 1
    %s4 = ssub.s32 %s3, 1
    %v5 = vld [vmem:[%s0] sm:%s4]
    %6 = vst [vmem:[#allocation0] sm:%s4] %v5
    %v7 = vld [vmem:[#allocation0] sm:$0x1]
    %vm8 = vcmask 80896
    %9 = vst.msk [vmem:[%s1] sm:$0x1] %vm8, %v7
    %v10 = vld [vmem:[#allocation0] sm:$0x1]
    %11 = vrot.lane.b32.xlu0 %v10, 118
    %v12 = vpop.permute.xlu0 %11
    %vm13 = vcmask 80896
    %s14 = scalar_lea.vmem %s1, 1
    %15 = vst.msk [vmem:[%s14] sm:$0x1] %vm13, %v12
    %v16 = vld [vmem:[#allocation0] sm:$0x1]
    %17 = vrot.lane.b32.xlu0 %v16, 108
    %v18 = vpop.permute.xlu0 %17
    %vm19 = vcmask 80896
    %s20 = scalar_lea.vmem %s1, 2
    %21 = vst.msk [vmem:[%s20] sm:$0x1] %vm19, %v18
    %v22 = vld [vmem:[#allocation0] sm:$0x1]
    %23 = vrot.lane.b32.xlu0 %v22, 98
    %v24 = vpop.permute.xlu0 %23
    %vm25 = vcmask 80896
    %s26 = scalar_lea.vmem %s1, 3
    %27 = vst.msk [vmem:[%s26] sm:$0x1] %vm25, %v24
    %v28 = vld [vmem:[#allocation0] sm:$0x1]
    %29 = vrot.lane.b32.xlu0 %v28, 88
    %v30 = vpop.permute.xlu0 %29
    %vm31 = vcmask 80896
    %s32 = scalar_lea.vmem %s1, 4
    %33 = vst.msk [vmem:[%s32] sm:$0x1] %vm31, %v30
    %v34 = vld [vmem:[#allocation0] sm:$0x1]
    %35 = vrot.lane.b32.xlu0 %v34, 78
    %v36 = vpop.permute.xlu0 %35
    %vm37 = vcmask 80896
    %s38 = scalar_lea.vmem %s1, 5
    %39 = vst.msk [vmem:[%s38] sm:$0x1] %vm37, %v36
    %v40 = vld [vmem:[#allocation0] sm:$0x1]
    %41 = vrot.lane.b32.xlu0 %v40, 68
    %v42 = vpop.permute.xlu0 %41
    %vm43 = vcmask 80896
    %s44 = scalar_lea.vmem %s1, 6
    %45 = vst.msk [vmem:[%s44] sm:$0x1] %vm43, %v42
    %v46 = vld [vmem:[#allocation0] sm:$0x1]
    %47 = vrot.lane.b32.xlu0 %v46, 58
    %v48 = vpop.permute.xlu0 %47
    %vm49 = vcmask 80896
    %s50 = scalar_lea.vmem %s1, 7
    %51 = vst.msk [vmem:[%s50] sm:$0x1] %vm49, %v48
    %v52 = vld [vmem:[#allocation0] sm:$0x1]
    %53 = vrot.lane.b32.xlu0 %v52, 48
    %v54 = vpop.permute.xlu0 %53
    %vm55 = vcmask 80896
    %s56 = scalar_lea.vmem %s1, 8
    %57 = vst.msk [vmem:[%s56] sm:$0x1] %vm55, %v54
    %v58 = vld [vmem:[#allocation0] sm:$0x1]
    %59 = vrot.lane.b32.xlu0 %v58, 38
    %v60 = vpop.permute.xlu0 %59
    %vm61 = vcmask 80896
    %s62 = scalar_lea.vmem %s1, 9
    %63 = vst.msk [vmem:[%s62] sm:$0x1] %vm61, %v60

// kernel: energy_latency_forward.1
$region0: #{energy_latency_forward.1}
  #allocation0 [shape = 'u32[]', space=smem, size = 0x4, offset = 0x4, fixed_abs, tag = 'smem constant byte address 0x4 - core index']
  #allocation1 [shape = 'u32[144,128]{1,0:T(1,128)}', space=vmem, size = 0x12000, scoped, tag = 'internal scratch']
  %s0 = inlined_call_operand.vmem [shape: bf16[1,2688], index: 0, kind: input, shape index: {}]
  %s1 = inlined_call_operand.hbm [shape: bf16[2688,128], index: 1, kind: input, shape index: {}]
  %s2 = inlined_call_operand.hbm [shape: bf16[384,128], index: 2, kind: input, shape index: {}]
  %s3 = inlined_call_operand.hbm [shape: bf16[128,384], index: 3, kind: input, shape index: {}]
  %s4 = inlined_call_operand.vmem [shape: f32[1,1024], index: 4, kind: input, shape index: {}]
  %s5 = inlined_call_operand.vmem [shape: f32[1,128], index: 5, kind: output, shape index: {}]
  %s6 = sld [smem:[#allocation0]]
  $region42: #{energy_latency_forward.1} parent=0
    _
  %s8 = ssub.s32 1, %s6
  %s9 = scalar_select 0, %s8, %s6
  $region1: #{energy_latency_forward.1} parent=0
    #allocation2 [shape = 'u8[688128]{0}', space=vmem, size = 0xa8000, scoped, tag = 'input window, operand 1, single buffered']
    #allocation3 [shape = 's32[1]{0}', space=sflag, size = 0x4, scoped, tag = 'scoped memory for energy_latency_forward.1']
    #allocation4 [shape = 'u8[98304]{0}', space=vmem, size = 0x18000, scoped, tag = 'input window, operand 2, single buffered']
    #allocation5 [shape = 's32[1]{0}', space=sflag, size = 0x4, scoped, tag = 'scoped memory for energy_latency_forward.1']
    #allocation6 [shape = 'u8[98304]{0}', space=vmem, size = 0x18000, scoped, tag = 'input window, operand 3, single buffered']
    %10 = vsyncpa [#allocation3], 0
    %11 = vsyncpa [#allocation5], 0
    // Predicated region
    $region2: #{energy_latency_forward.1} parent=1 // pred_check
      _
    $region3: #{energy_latency_forward.1} parent=1 // pred_check_branch
      %13 = sbr.rel (0) target = $region5
    $region4: #{energy_latency_forward.1} parent=1 // pred_region
      _
    $region5: #{energy_latency_forward.1} parent=1 // pred_fallthru
      _
    // Predicated region
    $region6: #{energy_latency_forward.1} parent=1 // pred_check
      _
    $region7: #{energy_latency_forward.1} parent=1 // pred_check_branch
      %15 = sbr.rel (0) target = $region9
    $region8: #{energy_latency_forward.1} parent=1 // pred_region
      %s17 = ssub.s32 21504, 21504
      %18 = vsyncadd [#allocation3], %s17
      %s19 = sshll.u32 [#allocation2], 4
      %s20 = int_to_ptr.vmem [resolvable:$true] %s19
      %25 = dma.hbm_to_vmem [thread:$0]  %s1, 21504, %s20, [#allocation3], 64, 64, 4
    $region9: #{energy_latency_forward.1} parent=1 // pred_fallthru
      _
    // Predicated region
    $region10: #{energy_latency_forward.1} parent=1 // pred_check
      _
    $region11: #{energy_latency_forward.1} parent=1 // pred_check_branch
      %27 = sbr.rel (0) target = $region13
    $region12: #{energy_latency_forward.1} parent=1 // pred_region
      %s29 = ssub.s32 3072, 3072
      %30 = vsyncadd [#allocation5], %s29
      %s31 = sshll.u32 [#allocation4], 4
      %s32 = int_to_ptr.vmem [resolvable:$true] %s31
      %37 = dma.hbm_to_vmem [thread:$0]  %s2, 3072, %s32, [#allocation5], 64, 64, 4
    $region13: #{energy_latency_forward.1} parent=1 // pred_fallthru
      _
    // Predicated region
    $region14: #{energy_latency_forward.1} parent=1 // pred_check
      _
    $region15: #{energy_latency_forward.1} parent=1 // pred_check_branch
      %39 = sbr.rel (0) target = $region17
    $region16: #{energy_latency_forward.1} parent=1 // pred_region
      %s41 = ssub.s32 3072, 3072
      %42 = vsyncadd [#allocation5], %s41
      %s43 = sshll.u32 [#allocation6], 4
      %s44 = int_to_ptr.vmem [resolvable:$true] %s43
      %49 = dma.hbm_to_vmem [thread:$0]  %s3, 3072, %s44, [#allocation5], 192, 192, 12
    $region17: #{energy_latency_forward.1} parent=1 // pred_fallthru
      _
    // Predicated region
    $region18: #{energy_latency_forward.1} parent=1 // pred_check
      _
    $region19: #{energy_latency_forward.1} parent=1 // pred_check_branch
      %51 = sbr.rel (0) target = $region21
    $region20: #{energy_latency_forward.1} parent=1 // pred_region
      _
    $region21: #{energy_latency_forward.1} parent=1 // pred_fallthru
      _
    // Predicated region
    $region22: #{energy_latency_forward.1} parent=1 // pred_check
      _
    $region23: #{energy_latency_forward.1} parent=1 // pred_check_branch
      %53 = sbr.rel (0) target = $region25
    $region24: #{energy_latency_forward.1} parent=1 // pred_region
      %54 = dma.done [#allocation3], 21504
    $region25: #{energy_latency_forward.1} parent=1 // pred_fallthru
      _
    // Predicated region
    $region26: #{energy_latency_forward.1} parent=1 // pred_check
      _
    $region27: #{energy_latency_forward.1} parent=1 // pred_check_branch
      %56 = sbr.rel (0) target = $region29
    $region28: #{energy_latency_forward.1} parent=1 // pred_region
      %57 = dma.done [#allocation5], 3072
    $region29: #{energy_latency_forward.1} parent=1 // pred_fallthru
      _
    // Predicated region
    $region30: #{energy_latency_forward.1} parent=1 // pred_check
      _
    $region31: #{energy_latency_forward.1} parent=1 // pred_check_branch
      %59 = sbr.rel (0) target = $region33
    $region32: #{energy_latency_forward.1} parent=1 // pred_region
      %60 = dma.done [#allocation5], 3072
    $region33: #{energy_latency_forward.1} parent=1 // pred_fallthru
      _
    %v62 = vld [vmem:[%s4] sm:$0xff]
    %v63 = vld [vmem:[%s0] sm:$0xff]
    %v64 = vld [vmem:[%s0 + $0x8] sm:$0xff]
    %v65 = vld [vmem:[%s0 + $0x10] sm:$0x1f]
    %v66 = vld [vmem:[#allocation2] sm:$0xf]
    %v67 = vld [vmem:[#allocation2 + $0x4] sm:$0xf]
    %v68 = vld [vmem:[#allocation2 + $0x8] sm:$0xf]
    %v69 = vld [vmem:[#allocation2 + $0xc] sm:$0xf]
    %v70 = vld [vmem:[#allocation2 + $0x10] sm:$0xf]
    %v71 = vld [vmem:[#allocation2 + $0x14] sm:$0xf]
    %v72 = vld [vmem:[#allocation2 + $0x18] sm:$0xf]
    %v73 = vld [vmem:[#allocation2 + $0x1c] sm:$0xf]
    %v74 = vld [vmem:[#allocation2 + $0x20] sm:$0xf]
    %v75 = vld [vmem:[#allocation2 + $0x24] sm:$0xf]
    %v76 = vld [vmem:[#allocation2 + $0x28] sm:$0xf]
    %v77 = vld [vmem:[#allocation2 + $0x2c] sm:$0xf]
    %v78 = vld [vmem:[#allocation2 + $0x30] sm:$0xf]
    %v79 = vld [vmem:[#allocation2 + $0x34] sm:$0xf]
    %v80 = vld [vmem:[#allocation2 + $0x38] sm:$0xf]
    %v81 = vld [vmem:[#allocation2 + $0x3c] sm:$0xf]
    %v82 = vld [vmem:[#allocation2 + $0x40] sm:$0xf]
    %v83 = vld [vmem:[#allocation2 + $0x44] sm:$0xf]
    %v84 = vld [vmem:[#allocation2 + $0x48] sm:$0xf]
    %v85 = vld [vmem:[#allocation2 + $0x4c] sm:$0xf]
    %v86 = vld [vmem:[#allocation2 + $0x50] sm:$0xf]
    %v87 = vld [vmem:[#allocation2 + $0x54] sm:$0xf]
    %v88 = vld [vmem:[#allocation2 + $0x58] sm:$0xf]
    %v89 = vld [vmem:[#allocation2 + $0x5c] sm:$0xf]
    %v90 = vld [vmem:[#allocation2 + $0x60] sm:$0xf]
    %v91 = vld [vmem:[#allocation2 + $0x64] sm:$0xf]
    %v92 = vld [vmem:[#allocation2 + $0x68] sm:$0xf]
    %v93 = vld [vmem:[#allocation2 + $0x6c] sm:$0xf]
    %v94 = vld [vmem:[#allocation2 + $0x70] sm:$0xf]
    %v95 = vld [vmem:[#allocation2 + $0x74] sm:$0xf]
    %v96 = vld [vmem:[#allocation2 + $0x78] sm:$0xf]
    %v97 = vld [vmem:[#allocation2 + $0x7c] sm:$0xf]
    %v98 = vld [vmem:[#allocation2 + $0x80] sm:$0xf]
    %v99 = vld [vmem:[#allocation2 + $0x84] sm:$0xf]
    %v100 = vld [vmem:[#allocation2 + $0x88] sm:$0xf]
    %v101 = vld [vmem:[#allocation2 + $0x8c] sm:$0xf]
    %v102 = vld [vmem:[#allocation2 + $0x90] sm:$0xf]
    %v103 = vld [vmem:[#allocation2 + $0x94] sm:$0xf]
    %v104 = vld [vmem:[#allocation2 + $0x98] sm:$0xf]
    %v105 = vld [vmem:[#allocation2 + $0x9c] sm:$0xf]
    %v106 = vld [vmem:[#allocation2 + $0xa0] sm:$0xf]
    %v107 = vld [vmem:[#allocation2 + $0xa4] sm:$0xf]
    %v108 = vld [vmem:[#allocation2 + $0xa8] sm:$0xf]
    %v109 = vld [vmem:[#allocation2 + $0xac] sm:$0xf]
    %v110 = vld [vmem:[#allocation2 + $0xb0] sm:$0xf]
    %v111 = vld [vmem:[#allocation2 + $0xb4] sm:$0xf]
    %v112 = vld [vmem:[#allocation2 + $0xb8] sm:$0xf]
    %v113 = vld [vmem:[#allocation2 + $0xbc] sm:$0xf]
    %v114 = vld [vmem:[#allocation2 + $0xc0] sm:$0xf]
    %v115 = vld [vmem:[#allocation2 + $0xc4] sm:$0xf]
    %v116 = vld [vmem:[#allocation2 + $0xc8] sm:$0xf]
    %v117 = vld [vmem:[#allocation2 + $0xcc] sm:$0xf]
    %v118 = vld [vmem:[#allocation2 + $0xd0] sm:$0xf]
    %v119 = vld [vmem:[#allocation2 + $0xd4] sm:$0xf]
    %v120 = vld [vmem:[#allocation2 + $0xd8] sm:$0xf]
    %v121 = vld [vmem:[#allocation2 + $0xdc] sm:$0xf]
    %v122 = vld [vmem:[#allocation2 + $0xe0] sm:$0xf]
    %v123 = vld [vmem:[#allocation2 + $0xe4] sm:$0xf]
    %v124 = vld [vmem:[#allocation2 + $0xe8] sm:$0xf]
    %v125 = vld [vmem:[#allocation2 + $0xec] sm:$0xf]
    %v126 = vld [vmem:[#allocation2 + $0xf0] sm:$0xf]
    %v127 = vld [vmem:[#allocation2 + $0xf4] sm:$0xf]
    %v128 = vld [vmem:[#allocation2 + $0xf8] sm:$0xf]
    %v129 = vld [vmem:[#allocation2 + $0xfc] sm:$0xf]
    %v130 = vld [vmem:[#allocation2 + $0x100] sm:$0xf]
    %v131 = vld [vmem:[#allocation2 + $0x104] sm:$0xf]
    %v132 = vld [vmem:[#allocation2 + $0x108] sm:$0xf]
    %v133 = vld [vmem:[#allocation2 + $0x10c] sm:$0xf]
    %v134 = vld [vmem:[#allocation2 + $0x110] sm:$0xf]
    %v135 = vld [vmem:[#allocation2 + $0x114] sm:$0xf]
    %v136 = vld [vmem:[#allocation2 + $0x118] sm:$0xf]
    %v137 = vld [vmem:[#allocation2 + $0x11c] sm:$0xf]
    %v138 = vld [vmem:[#allocation2 + $0x120] sm:$0xf]
    %v139 = vld [vmem:[#allocation2 + $0x124] sm:$0xf]
    %v140 = vld [vmem:[#allocation2 + $0x128] sm:$0xf]
    %v141 = vld [vmem:[#allocation2 + $0x12c] sm:$0xf]
    %v142 = vld [vmem:[#allocation2 + $0x130] sm:$0xf]
    %v143 = vld [vmem:[#allocation2 + $0x134] sm:$0xf]
    %v144 = vld [vmem:[#allocation2 + $0x138] sm:$0xf]
    %v145 = vld [vmem:[#allocation2 + $0x13c] sm:$0xf]
    %v146 = vld [vmem:[#allocation2 + $0x140] sm:$0xf]
    %v147 = vld [vmem:[#allocation2 + $0x144] sm:$0xf]
    %v148 = vld [vmem:[#allocation2 + $0x148] sm:$0xf]
    %v149 = vld [vmem:[#allocation2 + $0x14c] sm:$0xf]
    %v150 = vld [vmem:[#allocation2 + $0x150] sm:$0xf]
    %v151 = vld [vmem:[#allocation2 + $0x154] sm:$0xf]
    %v152 = vld [vmem:[#allocation2 + $0x158] sm:$0xf]
    %v153 = vld [vmem:[#allocation2 + $0x15c] sm:$0xf]
    %v154 = vld [vmem:[#allocation2 + $0x160] sm:$0xf]
    %v155 = vld [vmem:[#allocation2 + $0x164] sm:$0xf]
    %v156 = vld [vmem:[#allocation2 + $0x168] sm:$0xf]
    %v157 = vld [vmem:[#allocation2 + $0x16c] sm:$0xf]
    %v158 = vld [vmem:[#allocation2 + $0x170] sm:$0xf]
    %v159 = vld [vmem:[#allocation2 + $0x174] sm:$0xf]
    %v160 = vld [vmem:[#allocation2 + $0x178] sm:$0xf]
    %v161 = vld [vmem:[#allocation2 + $0x17c] sm:$0xf]
    %v162 = vld [vmem:[#allocation2 + $0x180] sm:$0xf]
    %v163 = vld [vmem:[#allocation2 + $0x184] sm:$0xf]
    %v164 = vld [vmem:[#allocation2 + $0x188] sm:$0xf]
    %v165 = vld [vmem:[#allocation2 + $0x18c] sm:$0xf]
    %v166 = vld [vmem:[#allocation2 + $0x190] sm:$0xf]
    %v167 = vld [vmem:[#allocation2 + $0x194] sm:$0xf]
    %v168 = vld [vmem:[#allocation2 + $0x198] sm:$0xf]
    %v169 = vld [vmem:[#allocation2 + $0x19c] sm:$0xf]
    %v170 = vld [vmem:[#allocation2 + $0x1a0] sm:$0xf]
    %v171 = vld [vmem:[#allocation2 + $0x1a4] sm:$0xf]
    %v172 = vld [vmem:[#allocation2 + $0x1a8] sm:$0xf]
    %v173 = vld [vmem:[#allocation2 + $0x1ac] sm:$0xf]
    %v174 = vld [vmem:[#allocation2 + $0x1b0] sm:$0xf]
    %v175 = vld [vmem:[#allocation2 + $0x1b4] sm:$0xf]
    %v176 = vld [vmem:[#allocation2 + $0x1b8] sm:$0xf]
    %v177 = vld [vmem:[#allocation2 + $0x1bc] sm:$0xf]
    %v178 = vld [vmem:[#allocation2 + $0x1c0] sm:$0xf]
    %v179 = vld [vmem:[#allocation2 + $0x1c4] sm:$0xf]
    %v180 = vld [vmem:[#allocation2 + $0x1c8] sm:$0xf]
    %v181 = vld [vmem:[#allocation2 + $0x1cc] sm:$0xf]
    %v182 = vld [vmem:[#allocation2 + $0x1d0] sm:$0xf]
    %v183 = vld [vmem:[#allocation2 + $0x1d4] sm:$0xf]
    %v184 = vld [vmem:[#allocation2 + $0x1d8] sm:$0xf]
    %v185 = vld [vmem:[#allocation2 + $0x1dc] sm:$0xf]
    %v186 = vld [vmem:[#allocation2 + $0x1e0] sm:$0xf]
    %v187 = vld [vmem:[#allocation2 + $0x1e4] sm:$0xf]
    %v188 = vld [vmem:[#allocation2 + $0x1e8] sm:$0xf]
    %v189 = vld [vmem:[#allocation2 + $0x1ec] sm:$0xf]
    %v190 = vld [vmem:[#allocation2 + $0x1f0] sm:$0xf]
    %v191 = vld [vmem:[#allocation2 + $0x1f4] sm:$0xf]
    %v192 = vld [vmem:[#allocation2 + $0x1f8] sm:$0xf]
    %v193 = vld [vmem:[#allocation2 + $0x1fc] sm:$0xf]
    %v194 = vld [vmem:[#allocation2 + $0x200] sm:$0xf]
    %v195 = vld [vmem:[#allocation2 + $0x204] sm:$0xf]
    %v196 = vld [vmem:[#allocation2 + $0x208] sm:$0xf]
    %v197 = vld [vmem:[#allocation2 + $0x20c] sm:$0xf]
    %v198 = vld [vmem:[#allocation2 + $0x210] sm:$0xf]
    %v199 = vld [vmem:[#allocation2 + $0x214] sm:$0xf]
    %v200 = vld [vmem:[#allocation2 + $0x218] sm:$0xf]
    %v201 = vld [vmem:[#allocation2 + $0x21c] sm:$0xf]
    %v202 = vld [vmem:[#allocation2 + $0x220] sm:$0xf]
    %v203 = vld [vmem:[#allocation2 + $0x224] sm:$0xf]
    %v204 = vld [vmem:[#allocation2 + $0x228] sm:$0xf]
    %v205 = vld [vmem:[#allocation2 + $0x22c] sm:$0xf]
    %v206 = vld [vmem:[#allocation2 + $0x230] sm:$0xf]
    %v207 = vld [vmem:[#allocation2 + $0x234] sm:$0xf]
    %v208 = vld [vmem:[#allocation2 + $0x238] sm:$0xf]
    %v209 = vld [vmem:[#allocation2 + $0x23c] sm:$0xf]
    %v210 = vld [vmem:[#allocation2 + $0x240] sm:$0xf]
    %v211 = vld [vmem:[#allocation2 + $0x244] sm:$0xf]
    %v212 = vld [vmem:[#allocation2 + $0x248] sm:$0xf]
    %v213 = vld [vmem:[#allocation2 + $0x24c] sm:$0xf]
    %v214 = vld [vmem:[#allocation2 + $0x250] sm:$0xf]
    %v215 = vld [vmem:[#allocation2 + $0x254] sm:$0xf]
    %v216 = vld [vmem:[#allocation2 + $0x258] sm:$0xf]
    %v217 = vld [vmem:[#allocation2 + $0x25c] sm:$0xf]
    %v218 = vld [vmem:[#allocation2 + $0x260] sm:$0xf]
    %v219 = vld [vmem:[#allocation2 + $0x264] sm:$0xf]
    %v220 = vld [vmem:[#allocation2 + $0x268] sm:$0xf]
    %v221 = vld [vmem:[#allocation2 + $0x26c] sm:$0xf]
    %v222 = vld [vmem:[#allocation2 + $0x270] sm:$0xf]
    %v223 = vld [vmem:[#allocation2 + $0x274] sm:$0xf]
    %v224 = vld [vmem:[#allocation2 + $0x278] sm:$0xf]
    %v225 = vld [vmem:[#allocation2 + $0x27c] sm:$0xf]
    %v226 = vld [vmem:[#allocation2 + $0x280] sm:$0xf]
    %v227 = vld [vmem:[#allocation2 + $0x284] sm:$0xf]
    %v228 = vld [vmem:[#allocation2 + $0x288] sm:$0xf]
    %v229 = vld [vmem:[#allocation2 + $0x28c] sm:$0xf]
    %v230 = vld [vmem:[#allocation2 + $0x290] sm:$0xf]
    %v231 = vld [vmem:[#allocation2 + $0x294] sm:$0xf]
    %v232 = vld [vmem:[#allocation2 + $0x298] sm:$0xf]
    %v233 = vld [vmem:[#allocation2 + $0x29c] sm:$0xf]
    %v234 = vld [vmem:[#allocation2 + $0x2a0] sm:$0xf]
    %v235 = vld [vmem:[#allocation2 + $0x2a4] sm:$0xf]
    %v236 = vld [vmem:[#allocation2 + $0x2a8] sm:$0xf]
    %v237 = vld [vmem:[#allocation2 + $0x2ac] sm:$0xf]
    %v238 = vld [vmem:[#allocation2 + $0x2b0] sm:$0xf]
    %v239 = vld [vmem:[#allocation2 + $0x2b4] sm:$0xf]
    %v240 = vld [vmem:[#allocation2 + $0x2b8] sm:$0xf]
    %v241 = vld [vmem:[#allocation2 + $0x2bc] sm:$0xf]
    %v242 = vld [vmem:[#allocation2 + $0x2c0] sm:$0xf]
    %v243 = vld [vmem:[#allocation2 + $0x2c4] sm:$0xf]
    %v244 = vld [vmem:[#allocation2 + $0x2c8] sm:$0xf]
    %v245 = vld [vmem:[#allocation2 + $0x2cc] sm:$0xf]
    %v246 = vld [vmem:[#allocation2 + $0x2d0] sm:$0xf]
    %v247 = vld [vmem:[#allocation2 + $0x2d4] sm:$0xf]
    %v248 = vld [vmem:[#allocation2 + $0x2d8] sm:$0xf]
    %v249 = vld [vmem:[#allocation2 + $0x2dc] sm:$0xf]
    %v250 = vld [vmem:[#allocation2 + $0x2e0] sm:$0xf]
    %v251 = vld [vmem:[#allocation2 + $0x2e4] sm:$0xf]
    %v252 = vld [vmem:[#allocation2 + $0x2e8] sm:$0xf]
    %v253 = vld [vmem:[#allocation2 + $0x2ec] sm:$0xf]
    %v254 = vld [vmem:[#allocation2 + $0x2f0] sm:$0xf]
    %v255 = vld [vmem:[#allocation2 + $0x2f4] sm:$0xf]
    %v256 = vld [vmem:[#allocation2 + $0x2f8] sm:$0xf]
    %v257 = vld [vmem:[#allocation2 + $0x2fc] sm:$0xf]
    %v258 = vld [vmem:[#allocation2 + $0x300] sm:$0xf]
    %v259 = vld [vmem:[#allocation2 + $0x304] sm:$0xf]
    %v260 = vld [vmem:[#allocation2 + $0x308] sm:$0xf]
    %v261 = vld [vmem:[#allocation2 + $0x30c] sm:$0xf]
    %v262 = vld [vmem:[#allocation2 + $0x310] sm:$0xf]
    %v263 = vld [vmem:[#allocation2 + $0x314] sm:$0xf]
    %v264 = vld [vmem:[#allocation2 + $0x318] sm:$0xf]
    %v265 = vld [vmem:[#allocation2 + $0x31c] sm:$0xf]
    %v266 = vld [vmem:[#allocation2 + $0x320] sm:$0xf]
    %v267 = vld [vmem:[#allocation2 + $0x324] sm:$0xf]
    %v268 = vld [vmem:[#allocation2 + $0x328] sm:$0xf]
    %v269 = vld [vmem:[#allocation2 + $0x32c] sm:$0xf]
    %v270 = vld [vmem:[#allocation2 + $0x330] sm:$0xf]
    %v271 = vld [vmem:[#allocation2 + $0x334] sm:$0xf]
    %v272 = vld [vmem:[#allocation2 + $0x338] sm:$0xf]
    %v273 = vld [vmem:[#allocation2 + $0x33c] sm:$0xf]
    %v274 = vld [vmem:[#allocation2 + $0x340] sm:$0xf]
    %v275 = vld [vmem:[#allocation2 + $0x344] sm:$0xf]
    %v276 = vld [vmem:[#allocation2 + $0x348] sm:$0xf]
    %v277 = vld [vmem:[#allocation2 + $0x34c] sm:$0xf]
    %v278 = vld [vmem:[#allocation2 + $0x350] sm:$0xf]
    %v279 = vld [vmem:[#allocation2 + $0x354] sm:$0xf]
    %v280 = vld [vmem:[#allocation2 + $0x358] sm:$0xf]
    %v281 = vld [vmem:[#allocation2 + $0x35c] sm:$0xf]
    %v282 = vld [vmem:[#allocation2 + $0x360] sm:$0xf]
    %v283 = vld [vmem:[#allocation2 + $0x364] sm:$0xf]
    %v284 = vld [vmem:[#allocation2 + $0x368] sm:$0xf]
    %v285 = vld [vmem:[#allocation2 + $0x36c] sm:$0xf]
    %v286 = vld [vmem:[#allocation2 + $0x370] sm:$0xf]
    %v287 = vld [vmem:[#allocation2 + $0x374] sm:$0xf]
    %v288 = vld [vmem:[#allocation2 + $0x378] sm:$0xf]
    %v289 = vld [vmem:[#allocation2 + $0x37c] sm:$0xf]
    %v290 = vld [vmem:[#allocation2 + $0x380] sm:$0xf]
    %v291 = vld [vmem:[#allocation2 + $0x384] sm:$0xf]
    %v292 = vld [vmem:[#allocation2 + $0x388] sm:$0xf]
    %v293 = vld [vmem:[#allocation2 + $0x38c] sm:$0xf]
    %v294 = vld [vmem:[#allocation2 + $0x390] sm:$0xf]
    %v295 = vld [vmem:[#allocation2 + $0x394] sm:$0xf]
    %v296 = vld [vmem:[#allocation2 + $0x398] sm:$0xf]
    %v297 = vld [vmem:[#allocation2 + $0x39c] sm:$0xf]
    %v298 = vld [vmem:[#allocation2 + $0x3a0] sm:$0xf]
    %v299 = vld [vmem:[#allocation2 + $0x3a4] sm:$0xf]
    %v300 = vld [vmem:[#allocation2 + $0x3a8] sm:$0xf]
    %v301 = vld [vmem:[#allocation2 + $0x3ac] sm:$0xf]
    %v302 = vld [vmem:[#allocation2 + $0x3b0] sm:$0xf]
    %v303 = vld [vmem:[#allocation2 + $0x3b4] sm:$0xf]
    %v304 = vld [vmem:[#allocation2 + $0x3b8] sm:$0xf]
    %v305 = vld [vmem:[#allocation2 + $0x3bc] sm:$0xf]
    %v306 = vld [vmem:[#allocation2 + $0x3c0] sm:$0xf]
    %v307 = vld [vmem:[#allocation2 + $0x3c4] sm:$0xf]
    %v308 = vld [vmem:[#allocation2 + $0x3c8] sm:$0xf]
    %v309 = vld [vmem:[#allocation2 + $0x3cc] sm:$0xf]
    %v310 = vld [vmem:[#allocation2 + $0x3d0] sm:$0xf]
    %v311 = vld [vmem:[#allocation2 + $0x3d4] sm:$0xf]
    %v312 = vld [vmem:[#allocation2 + $0x3d8] sm:$0xf]
    %v313 = vld [vmem:[#allocation2 + $0x3dc] sm:$0xf]
    %v314 = vld [vmem:[#allocation2 + $0x3e0] sm:$0xf]
    %v315 = vld [vmem:[#allocation2 + $0x3e4] sm:$0xf]
    %v316 = vld [vmem:[#allocation2 + $0x3e8] sm:$0xf]
    %v317 = vld [vmem:[#allocation2 + $0x3ec] sm:$0xf]
    %v318 = vld [vmem:[#allocation2 + $0x3f0] sm:$0xf]
    %v319 = vld [vmem:[#allocation2 + $0x3f4] sm:$0xf]
    %v320 = vld [vmem:[#allocation2 + $0x3f8] sm:$0xf]
    %v321 = vld [vmem:[#allocation2 + $0x3fc] sm:$0xf]
    %v322 = vld [vmem:[#allocation2 + $0x400] sm:$0xf]
    %v323 = vld [vmem:[#allocation2 + $0x404] sm:$0xf]
    %v324 = vld [vmem:[#allocation2 + $0x408] sm:$0xf]
    %v325 = vld [vmem:[#allocation2 + $0x40c] sm:$0xf]
    %v326 = vld [vmem:[#allocation2 + $0x410] sm:$0xf]
    %v327 = vld [vmem:[#allocation2 + $0x414] sm:$0xf]
    %v328 = vld [vmem:[#allocation2 + $0x418] sm:$0xf]
    %v329 = vld [vmem:[#allocation2 + $0x41c] sm:$0xf]
    %v330 = vld [vmem:[#allocation2 + $0x420] sm:$0xf]
    %v331 = vld [vmem:[#allocation2 + $0x424] sm:$0xf]
    %v332 = vld [vmem:[#allocation2 + $0x428] sm:$0xf]
    %v333 = vld [vmem:[#allocation2 + $0x42c] sm:$0xf]
    %v334 = vld [vmem:[#allocation2 + $0x430] sm:$0xf]
    %v335 = vld [vmem:[#allocation2 + $0x434] sm:$0xf]
    %v336 = vld [vmem:[#allocation2 + $0x438] sm:$0xf]
    %v337 = vld [vmem:[#allocation2 + $0x43c] sm:$0xf]
    %v338 = vld [vmem:[#allocation2 + $0x440] sm:$0xf]
    %v339 = vld [vmem:[#allocation2 + $0x444] sm:$0xf]
    %v340 = vld [vmem:[#allocation2 + $0x448] sm:$0xf]
    %v341 = vld [vmem:[#allocation2 + $0x44c] sm:$0xf]
    %v342 = vld [vmem:[#allocation2 + $0x450] sm:$0xf]
    %v343 = vld [vmem:[#allocation2 + $0x454] sm:$0xf]
    %v344 = vld [vmem:[#allocation2 + $0x458] sm:$0xf]
    %v345 = vld [vmem:[#allocation2 + $0x45c] sm:$0xf]
    %v346 = vld [vmem:[#allocation2 + $0x460] sm:$0xf]
    %v347 = vld [vmem:[#allocation2 + $0x464] sm:$0xf]
    %v348 = vld [vmem:[#allocation2 + $0x468] sm:$0xf]
    %v349 = vld [vmem:[#allocation2 + $0x46c] sm:$0xf]
    %v350 = vld [vmem:[#allocation2 + $0x470] sm:$0xf]
    %v351 = vld [vmem:[#allocation2 + $0x474] sm:$0xf]
    %v352 = vld [vmem:[#allocation2 + $0x478] sm:$0xf]
    %v353 = vld [vmem:[#allocation2 + $0x47c] sm:$0xf]
    %v354 = vld [vmem:[#allocation2 + $0x480] sm:$0xf]
    %v355 = vld [vmem:[#allocation2 + $0x484] sm:$0xf]
    %v356 = vld [vmem:[#allocation2 + $0x488] sm:$0xf]
    %v357 = vld [vmem:[#allocation2 + $0x48c] sm:$0xf]
    %v358 = vld [vmem:[#allocation2 + $0x490] sm:$0xf]
    %v359 = vld [vmem:[#allocation2 + $0x494] sm:$0xf]
    %v360 = vld [vmem:[#allocation2 + $0x498] sm:$0xf]
    %v361 = vld [vmem:[#allocation2 + $0x49c] sm:$0xf]
    %v362 = vld [vmem:[#allocation2 + $0x4a0] sm:$0xf]
    %v363 = vld [vmem:[#allocation2 + $0x4a4] sm:$0xf]
    %v364 = vld [vmem:[#allocation2 + $0x4a8] sm:$0xf]
    %v365 = vld [vmem:[#allocation2 + $0x4ac] sm:$0xf]
    %v366 = vld [vmem:[#allocation2 + $0x4b0] sm:$0xf]
    %v367 = vld [vmem:[#allocation2 + $0x4b4] sm:$0xf]
    %v368 = vld [vmem:[#allocation2 + $0x4b8] sm:$0xf]
    %v369 = vld [vmem:[#allocation2 + $0x4bc] sm:$0xf]
    %v370 = vld [vmem:[#allocation2 + $0x4c0] sm:$0xf]
    %v371 = vld [vmem:[#allocation2 + $0x4c4] sm:$0xf]
    %v372 = vld [vmem:[#allocation2 + $0x4c8] sm:$0xf]
    %v373 = vld [vmem:[#allocation2 + $0x4cc] sm:$0xf]
    %v374 = vld [vmem:[#allocation2 + $0x4d0] sm:$0xf]
    %v375 = vld [vmem:[#allocation2 + $0x4d4] sm:$0xf]
    %v376 = vld [vmem:[#allocation2 + $0x4d8] sm:$0xf]
    %v377 = vld [vmem:[#allocation2 + $0x4dc] sm:$0xf]
    %v378 = vld [vmem:[#allocation2 + $0x4e0] sm:$0xf]
    %v379 = vld [vmem:[#allocation2 + $0x4e4] sm:$0xf]
    %v380 = vld [vmem:[#allocation2 + $0x4e8] sm:$0xf]
    %v381 = vld [vmem:[#allocation2 + $0x4ec] sm:$0xf]
    %v382 = vld [vmem:[#allocation2 + $0x4f0] sm:$0xf]
    %v383 = vld [vmem:[#allocation2 + $0x4f4] sm:$0xf]
    %v384 = vld [vmem:[#allocation2 + $0x4f8] sm:$0xf]
    %v385 = vld [vmem:[#allocation2 + $0x4fc] sm:$0xf]
    %v386 = vld [vmem:[#allocation2 + $0x500] sm:$0xf]
    %v387 = vld [vmem:[#allocation2 + $0x504] sm:$0xf]
    %v388 = vld [vmem:[#allocation2 + $0x508] sm:$0xf]
    %v389 = vld [vmem:[#allocation2 + $0x50c] sm:$0xf]
    %v390 = vld [vmem:[#allocation2 + $0x510] sm:$0xf]
    %v391 = vld [vmem:[#allocation2 + $0x514] sm:$0xf]
    %v392 = vld [vmem:[#allocation2 + $0x518] sm:$0xf]
    %v393 = vld [vmem:[#allocation2 + $0x51c] sm:$0xf]
    %v394 = vld [vmem:[#allocation2 + $0x520] sm:$0xf]
    %v395 = vld [vmem:[#allocation2 + $0x524] sm:$0xf]
    %v396 = vld [vmem:[#allocation2 + $0x528] sm:$0xf]
    %v397 = vld [vmem:[#allocation2 + $0x52c] sm:$0xf]
    %v398 = vld [vmem:[#allocation2 + $0x530] sm:$0xf]
    %v399 = vld [vmem:[#allocation2 + $0x534] sm:$0xf]
    %v400 = vld [vmem:[#allocation2 + $0x538] sm:$0xf]
    %v401 = vld [vmem:[#allocation2 + $0x53c] sm:$0xf]
    %v405 = vcombine.high %v63, %v63
    %v407 = vunpack.c.l.s4 1966171168
    %v408 = vunpack.c.0.s8 %v407
    %v409 = vlaneseq
    %v410 = vshrl.u32 %v409, 7
    %v411 = vsub.s32 %v408, %v410
    %v412 = vrot.slane %v63, %v411
    %v414 = vunpack.c.l.s4 1966171168
    %v415 = vunpack.c.0.s8 %v414
    %v416 = vlaneseq
    %v417 = vshrl.u32 %v416, 7
    %v418 = vsub.s32 %v415, %v417
    %v419 = vrot.slane %v405, %v418
    %v420 = vcombine.high %v412, %v412
    %v421 = vcombine.high %v419, %v419
    %v423 = vunpack.c.l.s4 1966171168
    %v424 = vunpack.c.0.s8 %v423
    %v425 = vlaneseq
    %v426 = vshrl.u32 %v425, 7
    %v427 = vsub.s32 %v424, %v426
    %v428 = vrot.slane %v412, %v427
    %v430 = vunpack.c.l.s4 1966171168
    %v431 = vunpack.c.0.s8 %v430
    %v432 = vlaneseq
    %v433 = vshrl.u32 %v432, 7
    %v434 = vsub.s32 %v431, %v433
    %v435 = vrot.slane %v419, %v434
    %v437 = vunpack.c.l.s4 1966171168
    %v438 = vunpack.c.0.s8 %v437
    %v439 = vlaneseq
    %v440 = vshrl.u32 %v439, 7
    %v441 = vsub.s32 %v438, %v440
    %v442 = vrot.slane %v420, %v441
    %v444 = vunpack.c.l.s4 1966171168
    %v445 = vunpack.c.0.s8 %v444
    %v446 = vlaneseq
    %v447 = vshrl.u32 %v446, 7
    %v448 = vsub.s32 %v445, %v447
    %v449 = vrot.slane %v421, %v448
    %v450 = vcombine.high %v428, %v428
    %v451 = vcombine.high %v435, %v435
    %v452 = vcombine.high %v442, %v442
    %v453 = vcombine.high %v449, %v449
    %v454 = vcombine.high %v64, %v64
    %v456 = vunpack.c.l.s4 1966171168
    %v457 = vunpack.c.0.s8 %v456
    %v458 = vlaneseq
    %v459 = vshrl.u32 %v458, 7
    %v460 = vsub.s32 %v457, %v459
    %v461 = vrot.slane %v64, %v460
    %v463 = vunpack.c.l.s4 1966171168
    %v464 = vunpack.c.0.s8 %v463
    %v465 = vlaneseq
    %v466 = vshrl.u32 %v465, 7
    %v467 = vsub.s32 %v464, %v466
    %v468 = vrot.slane %v454, %v467
    %v469 = vcombine.high %v461, %v461
    %v470 = vcombine.high %v468, %v468
    %v472 = vunpack.c.l.s4 1966171168
    %v473 = vunpack.c.0.s8 %v472
    %v474 = vlaneseq
    %v475 = vshrl.u32 %v474, 7
    %v476 = vsub.s32 %v473, %v475
    %v477 = vrot.slane %v461, %v476
    %v479 = vunpack.c.l.s4 1966171168
    %v480 = vunpack.c.0.s8 %v479
    %v481 = vlaneseq
    %v482 = vshrl.u32 %v481, 7
    %v483 = vsub.s32 %v480, %v482
    %v484 = vrot.slane %v468, %v483
    %v486 = vunpack.c.l.s4 1966171168
    %v487 = vunpack.c.0.s8 %v486
    %v488 = vlaneseq
    %v489 = vshrl.u32 %v488, 7
    %v490 = vsub.s32 %v487, %v489
    %v491 = vrot.slane %v469, %v490
    %v493 = vunpack.c.l.s4 1966171168
    %v494 = vunpack.c.0.s8 %v493
    %v495 = vlaneseq
    %v496 = vshrl.u32 %v495, 7
    %v497 = vsub.s32 %v494, %v496
    %v498 = vrot.slane %v470, %v497
    %v499 = vcombine.high %v477, %v477
    %v500 = vcombine.high %v484, %v484
    %v501 = vcombine.high %v491, %v491
    %v502 = vcombine.high %v498, %v498
    %v503 = vcombine.high %v65, %v65
    %v505 = vunpack.c.l.s4 1966171168
    %v506 = vunpack.c.0.s8 %v505
    %v507 = vlaneseq
    %v508 = vshrl.u32 %v507, 7
    %v509 = vsub.s32 %v506, %v508
    %v510 = vrot.slane %v65, %v509
    %v512 = vunpack.c.l.s4 1966171168
    %v513 = vunpack.c.0.s8 %v512
    %v514 = vlaneseq
    %v515 = vshrl.u32 %v514, 7
    %v516 = vsub.s32 %v513, %v515
    %v517 = vrot.slane %v503, %v516
    %v518 = vcombine.high %v510, %v510
    %v520 = vunpack.c.l.s4 1966171168
    %v521 = vunpack.c.0.s8 %v520
    %v522 = vlaneseq
    %v523 = vshrl.u32 %v522, 7
    %v524 = vsub.s32 %v521, %v523
    %v525 = vrot.slane %v510, %v524
    %v527 = vunpack.c.l.s4 1966171168
    %v528 = vunpack.c.0.s8 %v527
    %v529 = vlaneseq
    %v530 = vshrl.u32 %v529, 7
    %v531 = vsub.s32 %v528, %v530
    %v532 = vrot.slane %v517, %v531
    %v534 = vunpack.c.l.s4 1966171168
    %v535 = vunpack.c.0.s8 %v534
    %v536 = vlaneseq
    %v537 = vshrl.u32 %v536, 7
    %v538 = vsub.s32 %v535, %v537
    %v539 = vrot.slane %v518, %v538
    %v540 = vcombine.high %v525, %v525
    %v541 = vcombine.high %v539, %v539
    %v899 = vunpack.c.l.b16 %v66
    %v900 = vunpack.c.l.b16 %v67
    %v901 = vunpack.c.l.b16 %v68
    %v902 = vunpack.c.l.b16 %v69
    %v903 = vunpack.c.l.b16 %v70
    %v904 = vunpack.c.l.b16 %v71
    %v905 = vunpack.c.l.b16 %v72
    %v906 = vunpack.c.l.b16 %v73
    %v907 = vunpack.c.l.b16 %v74
    %v908 = vunpack.c.l.b16 %v75
    %v909 = vunpack.c.l.b16 %v76
    %v910 = vunpack.c.l.b16 %v77
    %v911 = vunpack.c.l.b16 %v78
    %v912 = vunpack.c.l.b16 %v79
    %v913 = vunpack.c.l.b16 %v80
    %v914 = vunpack.c.l.b16 %v81
    %v915 = vunpack.c.l.b16 %v82
    %v916 = vunpack.c.l.b16 %v83
    %v917 = vunpack.c.l.b16 %v84
    %v918 = vunpack.c.l.b16 %v85
    %v919 = vunpack.c.l.b16 %v86
    %v920 = vunpack.c.l.b16 %v87
    %v921 = vunpack.c.l.b16 %v88
    %v922 = vunpack.c.l.b16 %v89
    %v923 = vunpack.c.l.b16 %v90
    %v924 = vunpack.c.l.b16 %v91
    %v925 = vunpack.c.l.b16 %v92
    %v926 = vunpack.c.l.b16 %v93
    %v927 = vunpack.c.l.b16 %v94
    %v928 = vunpack.c.l.b16 %v95
    %v929 = vunpack.c.l.b16 %v96
    %v930 = vunpack.c.l.b16 %v97
    %v931 = vunpack.c.l.b16 %v98
    %v932 = vunpack.c.l.b16 %v99
    %v933 = vunpack.c.l.b16 %v100
    %v934 = vunpack.c.l.b16 %v101
    %v935 = vunpack.c.l.b16 %v102
    %v936 = vunpack.c.l.b16 %v103
    %v937 = vunpack.c.l.b16 %v104
    %v938 = vunpack.c.l.b16 %v105
    %v939 = vunpack.c.l.b16 %v106
    %v940 = vunpack.c.l.b16 %v107
    %v941 = vunpack.c.l.b16 %v108
    %v942 = vunpack.c.l.b16 %v109
    %v943 = vunpack.c.l.b16 %v110
    %v944 = vunpack.c.l.b16 %v111
    %v945 = vunpack.c.l.b16 %v112
    %v946 = vunpack.c.l.b16 %v113
    %v947 = vunpack.c.l.b16 %v114
    %v948 = vunpack.c.l.b16 %v115
    %v949 = vunpack.c.l.b16 %v116
    %v950 = vunpack.c.l.b16 %v117
    %v951 = vunpack.c.l.b16 %v118
    %v952 = vunpack.c.l.b16 %v119
    %v953 = vunpack.c.l.b16 %v120
    %v954 = vunpack.c.l.b16 %v121
    %v955 = vunpack.c.l.b16 %v122
    %v956 = vunpack.c.l.b16 %v123
    %v957 = vunpack.c.l.b16 %v124
    %v958 = vunpack.c.l.b16 %v125
    %v959 = vunpack.c.l.b16 %v126
    %v960 = vunpack.c.l.b16 %v127
    %v961 = vunpack.c.l.b16 %v128
    %v962 = vunpack.c.l.b16 %v129
    %v963 = vunpack.c.l.b16 %v130
    %v964 = vunpack.c.l.b16 %v131
    %v965 = vunpack.c.l.b16 %v132
    %v966 = vunpack.c.l.b16 %v133
    %v967 = vunpack.c.l.b16 %v134
    %v968 = vunpack.c.l.b16 %v135
    %v969 = vunpack.c.l.b16 %v136
    %v970 = vunpack.c.l.b16 %v137
    %v971 = vunpack.c.l.b16 %v138
    %v972 = vunpack.c.l.b16 %v139
    %v973 = vunpack.c.l.b16 %v140
    %v974 = vunpack.c.l.b16 %v141
    %v975 = vunpack.c.l.b16 %v142
    %v976 = vunpack.c.l.b16 %v143
    %v977 = vunpack.c.l.b16 %v144
    %v978 = vunpack.c.l.b16 %v145
    %v979 = vunpack.c.l.b16 %v146
    %v980 = vunpack.c.l.b16 %v147
    %v981 = vunpack.c.l.b16 %v148
    %v982 = vunpack.c.l.b16 %v149
    %v983 = vunpack.c.l.b16 %v150
    %v984 = vunpack.c.l.b16 %v151
    %v985 = vunpack.c.l.b16 %v152
    %v986 = vunpack.c.l.b16 %v153
    %v987 = vunpack.c.l.b16 %v154
    %v988 = vunpack.c.l.b16 %v155
    %v989 = vunpack.c.l.b16 %v156
    %v990 = vunpack.c.l.b16 %v157
    %v991 = vunpack.c.l.b16 %v158
    %v992 = vunpack.c.l.b16 %v159
    %v993 = vunpack.c.l.b16 %v160
    %v994 = vunpack.c.l.b16 %v161
    %v995 = vunpack.c.l.b16 %v162
    %v996 = vunpack.c.l.b16 %v163
    %v997 = vunpack.c.l.b16 %v164
    %v998 = vunpack.c.l.b16 %v165
    %v999 = vunpack.c.l.b16 %v166
    %v1000 = vunpack.c.l.b16 %v167
    %v1001 = vunpack.c.l.b16 %v168
    %v1002 = vunpack.c.l.b16 %v169
    %v1003 = vunpack.c.l.b16 %v170
    %v1004 = vunpack.c.l.b16 %v171
    %v1005 = vunpack.c.l.b16 %v172
    %v1006 = vunpack.c.l.b16 %v173
    %v1007 = vunpack.c.l.b16 %v174
    %v1008 = vunpack.c.l.b16 %v175
    %v1009 = vunpack.c.l.b16 %v176
    %v1010 = vunpack.c.l.b16 %v177
    %v1011 = vunpack.c.l.b16 %v178
    %v1012 = vunpack.c.l.b16 %v179
    %v1013 = vunpack.c.l.b16 %v180
    %v1014 = vunpack.c.l.b16 %v181
    %v1015 = vunpack.c.l.b16 %v182
    %v1016 = vunpack.c.l.b16 %v183
    %v1017 = vunpack.c.l.b16 %v184
    %v1018 = vunpack.c.l.b16 %v185
    %v1019 = vunpack.c.l.b16 %v186
    %v1020 = vunpack.c.l.b16 %v187
    %v1021 = vunpack.c.l.b16 %v188
    %v1022 = vunpack.c.l.b16 %v189
    %v1023 = vunpack.c.l.b16 %v190
    %v1024 = vunpack.c.l.b16 %v191
    %v1025 = vunpack.c.l.b16 %v192
    %v1026 = vunpack.c.l.b16 %v193
    %v1027 = vunpack.c.l.b16 %v194
    %v1028 = vunpack.c.l.b16 %v195
    %v1029 = vunpack.c.l.b16 %v196
    %v1030 = vunpack.c.l.b16 %v197
    %v1031 = vunpack.c.l.b16 %v198
    %v1032 = vunpack.c.l.b16 %v199
    %v1033 = vunpack.c.l.b16 %v200
    %v1034 = vunpack.c.l.b16 %v201
    %v1035 = vunpack.c.l.b16 %v202
    %v1036 = vunpack.c.l.b16 %v203
    %v1037 = vunpack.c.l.b16 %v204
    %v1038 = vunpack.c.l.b16 %v205
    %v1039 = vunpack.c.l.b16 %v206
    %v1040 = vunpack.c.l.b16 %v207
    %v1041 = vunpack.c.l.b16 %v208
    %v1042 = vunpack.c.l.b16 %v209
    %v1043 = vunpack.c.l.b16 %v210
    %v1044 = vunpack.c.l.b16 %v211
    %v1045 = vunpack.c.l.b16 %v212
    %v1046 = vunpack.c.l.b16 %v213
    %v1047 = vunpack.c.l.b16 %v214
    %v1048 = vunpack.c.l.b16 %v215
    %v1049 = vunpack.c.l.b16 %v216
    %v1050 = vunpack.c.l.b16 %v217
    %v1051 = vunpack.c.l.b16 %v218
    %v1052 = vunpack.c.l.b16 %v219
    %v1053 = vunpack.c.l.b16 %v220
    %v1054 = vunpack.c.l.b16 %v221
    %v1055 = vunpack.c.l.b16 %v222
    %v1056 = vunpack.c.l.b16 %v223
    %v1057 = vunpack.c.l.b16 %v224
    %v1058 = vunpack.c.l.b16 %v225
    %v1059 = vunpack.c.l.b16 %v226
    %v1060 = vunpack.c.l.b16 %v227
    %v1061 = vunpack.c.l.b16 %v228
    %v1062 = vunpack.c.l.b16 %v229
    %v1063 = vunpack.c.l.b16 %v230
    %v1064 = vunpack.c.l.b16 %v231
    %v1065 = vunpack.c.l.b16 %v232
    %v1066 = vunpack.c.l.b16 %v233
    %v1067 = vunpack.c.l.b16 %v234
    %v1068 = vunpack.c.l.b16 %v235
    %v1069 = vunpack.c.l.b16 %v236
    %v1070 = vunpack.c.l.b16 %v237
    %v1071 = vunpack.c.l.b16 %v238
    %v1072 = vunpack.c.l.b16 %v239
    %v1073 = vunpack.c.l.b16 %v240
    %v1074 = vunpack.c.l.b16 %v241
    %v1075 = vunpack.c.l.b16 %v242
    %v1076 = vunpack.c.l.b16 %v243
    %v1077 = vunpack.c.l.b16 %v244
    %v1078 = vunpack.c.l.b16 %v245
    %v1079 = vunpack.c.l.b16 %v246
    %v1080 = vunpack.c.l.b16 %v247
    %v1081 = vunpack.c.l.b16 %v248
    %v1082 = vunpack.c.l.b16 %v249
    %v1083 = vunpack.c.l.b16 %v250
    %v1084 = vunpack.c.l.b16 %v251
    %v1085 = vunpack.c.l.b16 %v252
    %v1086 = vunpack.c.l.b16 %v253
    %v1087 = vunpack.c.l.b16 %v254
    %v1088 = vunpack.c.l.b16 %v255
    %v1089 = vunpack.c.l.b16 %v256
    %v1090 = vunpack.c.l.b16 %v257
    %v1091 = vunpack.c.l.b16 %v258
    %v1092 = vunpack.c.l.b16 %v259
    %v1093 = vunpack.c.l.b16 %v260
    %v1094 = vunpack.c.l.b16 %v261
    %v1095 = vunpack.c.l.b16 %v262
    %v1096 = vunpack.c.l.b16 %v263
    %v1097 = vunpack.c.l.b16 %v264
    %v1098 = vunpack.c.l.b16 %v265
    %v1099 = vunpack.c.l.b16 %v266
    %v1100 = vunpack.c.l.b16 %v267
    %v1101 = vunpack.c.l.b16 %v268
    %v1102 = vunpack.c.l.b16 %v269
    %v1103 = vunpack.c.l.b16 %v270
    %v1104 = vunpack.c.l.b16 %v271
    %v1105 = vunpack.c.l.b16 %v272
    %v1106 = vunpack.c.l.b16 %v273
    %v1107 = vunpack.c.l.b16 %v274
    %v1108 = vunpack.c.l.b16 %v275
    %v1109 = vunpack.c.l.b16 %v276
    %v1110 = vunpack.c.l.b16 %v277
    %v1111 = vunpack.c.l.b16 %v278
    %v1112 = vunpack.c.l.b16 %v279
    %v1113 = vunpack.c.l.b16 %v280
    %v1114 = vunpack.c.l.b16 %v281
    %v1115 = vunpack.c.l.b16 %v282
    %v1116 = vunpack.c.l.b16 %v283
    %v1117 = vunpack.c.l.b16 %v284
    %v1118 = vunpack.c.l.b16 %v285
    %v1119 = vunpack.c.l.b16 %v286
    %v1120 = vunpack.c.l.b16 %v287
    %v1121 = vunpack.c.l.b16 %v288
    %v1122 = vunpack.c.l.b16 %v289
    %v1123 = vunpack.c.l.b16 %v290
    %v1124 = vunpack.c.l.b16 %v291
    %v1125 = vunpack.c.l.b16 %v292
    %v1126 = vunpack.c.l.b16 %v293
    %v1127 = vunpack.c.l.b16 %v294
    %v1128 = vunpack.c.l.b16 %v295
    %v1129 = vunpack.c.l.b16 %v296
    %v1130 = vunpack.c.l.b16 %v297
    %v1131 = vunpack.c.l.b16 %v298
    %v1132 = vunpack.c.l.b16 %v299
    %v1133 = vunpack.c.l.b16 %v300
    %v1134 = vunpack.c.l.b16 %v301
    %v1135 = vunpack.c.l.b16 %v302
    %v1136 = vunpack.c.l.b16 %v303
    %v1137 = vunpack.c.l.b16 %v304
    %v1138 = vunpack.c.l.b16 %v305
    %v1139 = vunpack.c.l.b16 %v306
    %v1140 = vunpack.c.l.b16 %v307
    %v1141 = vunpack.c.l.b16 %v308
    %v1142 = vunpack.c.l.b16 %v309
    %v1143 = vunpack.c.l.b16 %v310
    %v1144 = vunpack.c.l.b16 %v311
    %v1145 = vunpack.c.l.b16 %v312
    %v1146 = vunpack.c.l.b16 %v313
    %v1147 = vunpack.c.l.b16 %v314
    %v1148 = vunpack.c.l.b16 %v315
    %v1149 = vunpack.c.l.b16 %v316
    %v1150 = vunpack.c.l.b16 %v317
    %v1151 = vunpack.c.l.b16 %v318
    %v1152 = vunpack.c.l.b16 %v319
    %v1153 = vunpack.c.l.b16 %v320
    %v1154 = vunpack.c.l.b16 %v321
    %v1155 = vunpack.c.l.b16 %v322
    %v1156 = vunpack.c.l.b16 %v323
    %v1157 = vunpack.c.l.b16 %v324
    %v1158 = vunpack.c.l.b16 %v325
    %v1159 = vunpack.c.l.b16 %v326
    %v1160 = vunpack.c.l.b16 %v327
    %v1161 = vunpack.c.l.b16 %v328
    %v1162 = vunpack.c.l.b16 %v329
    %v1163 = vunpack.c.l.b16 %v330
    %v1164 = vunpack.c.l.b16 %v331
    %v1165 = vunpack.c.l.b16 %v332
    %v1166 = vunpack.c.l.b16 %v333
    %v1167 = vunpack.c.l.b16 %v334
    %v1168 = vunpack.c.l.b16 %v335
    %v1169 = vunpack.c.l.b16 %v336
    %v1170 = vunpack.c.l.b16 %v337
    %v1171 = vunpack.c.l.b16 %v338
    %v1172 = vunpack.c.l.b16 %v339
    %v1173 = vunpack.c.l.b16 %v340
    %v1174 = vunpack.c.l.b16 %v341
    %v1175 = vunpack.c.l.b16 %v342
    %v1176 = vunpack.c.l.b16 %v343
    %v1177 = vunpack.c.l.b16 %v344
    %v1178 = vunpack.c.l.b16 %v345
    %v1179 = vunpack.c.l.b16 %v346
    %v1180 = vunpack.c.l.b16 %v347
    %v1181 = vunpack.c.l.b16 %v348
    %v1182 = vunpack.c.l.b16 %v349
    %v1183 = vunpack.c.l.b16 %v350
    %v1184 = vunpack.c.l.b16 %v351
    %v1185 = vunpack.c.l.b16 %v352
    %v1186 = vunpack.c.l.b16 %v353
    %v1187 = vunpack.c.l.b16 %v354
    %v1188 = vunpack.c.l.b16 %v355
    %v1189 = vunpack.c.l.b16 %v356
    %v1190 = vunpack.c.l.b16 %v357
    %v1191 = vunpack.c.l.b16 %v358
    %v1192 = vunpack.c.l.b16 %v359
    %v1193 = vunpack.c.l.b16 %v360
    %v1194 = vunpack.c.l.b16 %v361
    %v1195 = vunpack.c.l.b16 %v362
    %v1196 = vunpack.c.l.b16 %v363
    %v1197 = vunpack.c.l.b16 %v364
    %v1198 = vunpack.c.l.b16 %v365
    %v1199 = vunpack.c.l.b16 %v366
    %v1200 = vunpack.c.l.b16 %v367
    %v1201 = vunpack.c.l.b16 %v368
    %v1202 = vunpack.c.l.b16 %v369
    %v1203 = vunpack.c.l.b16 %v370
    %v1204 = vunpack.c.l.b16 %v371
    %v1205 = vunpack.c.l.b16 %v372
    %v1206 = vunpack.c.l.b16 %v373
    %v1207 = vunpack.c.l.b16 %v374
    %v1208 = vunpack.c.l.b16 %v375
    %v1209 = vunpack.c.l.b16 %v376
    %v1210 = vunpack.c.l.b16 %v377
    %v1211 = vunpack.c.l.b16 %v378
    %v1212 = vunpack.c.l.b16 %v379
    %v1213 = vunpack.c.l.b16 %v380
    %v1214 = vunpack.c.l.b16 %v381
    %v1215 = vunpack.c.l.b16 %v382
    %v1216 = vunpack.c.l.b16 %v383
    %v1217 = vunpack.c.l.b16 %v384
    %v1218 = vunpack.c.l.b16 %v385
    %v1219 = vunpack.c.l.b16 %v386
    %v1220 = vunpack.c.l.b16 %v387
    %v1221 = vunpack.c.l.b16 %v388
    %v1222 = vunpack.c.l.b16 %v389
    %v1223 = vunpack.c.l.b16 %v390
    %v1224 = vunpack.c.l.b16 %v391
    %v1225 = vunpack.c.l.b16 %v392
    %v1226 = vunpack.c.l.b16 %v393
    %v1227 = vunpack.c.l.b16 %v394
    %v1228 = vunpack.c.l.b16 %v395
    %v1229 = vunpack.c.l.b16 %v396
    %v1230 = vunpack.c.l.b16 %v397
    %v1231 = vunpack.c.l.b16 %v398
    %v1232 = vunpack.c.l.b16 %v399
    %v1233 = vunpack.c.l.b16 %v400
    %v1234 = vunpack.c.l.b16 %v401
    %v1235 = vpack.c.b16 %v900, %v899
    %v1236 = vpack.c.b16 %v902, %v901
    %v1237 = vpack.c.b16 %v904, %v903
    %v1238 = vpack.c.b16 %v906, %v905
    %v1239 = vpack.c.b16 %v908, %v907
    %v1240 = vpack.c.b16 %v910, %v909
    %v1241 = vpack.c.b16 %v912, %v911
    %v1242 = vpack.c.b16 %v914, %v913
    %v1243 = vpack.c.b16 %v916, %v915
    %v1244 = vpack.c.b16 %v918, %v917
    %v1245 = vpack.c.b16 %v920, %v919
    %v1246 = vpack.c.b16 %v922, %v921
    %v1247 = vpack.c.b16 %v924, %v923
    %v1248 = vpack.c.b16 %v926, %v925
    %v1249 = vpack.c.b16 %v928, %v927
    %v1250 = vpack.c.b16 %v930, %v929
    %v1251 = vpack.c.b16 %v932, %v931
    %v1252 = vpack.c.b16 %v934, %v933
    %v1253 = vpack.c.b16 %v936, %v935
    %v1254 = vpack.c.b16 %v938, %v937
    %v1255 = vpack.c.b16 %v940, %v939
    %v1256 = vpack.c.b16 %v942, %v941
    %v1257 = vpack.c.b16 %v944, %v943
    %v1258 = vpack.c.b16 %v946, %v945
    %v1259 = vpack.c.b16 %v948, %v947
    %v1260 = vpack.c.b16 %v950, %v949
    %v1261 = vpack.c.b16 %v952, %v951
    %v1262 = vpack.c.b16 %v954, %v953
    %v1263 = vpack.c.b16 %v956, %v955
    %v1264 = vpack.c.b16 %v958, %v957
    %v1265 = vpack.c.b16 %v960, %v959
    %v1266 = vpack.c.b16 %v962, %v961
    %v1267 = vpack.c.b16 %v964, %v963
    %v1268 = vpack.c.b16 %v966, %v965
    %v1269 = vpack.c.b16 %v968, %v967
    %v1270 = vpack.c.b16 %v970, %v969
    %v1271 = vpack.c.b16 %v972, %v971
    %v1272 = vpack.c.b16 %v974, %v973
    %v1273 = vpack.c.b16 %v976, %v975
    %v1274 = vpack.c.b16 %v978, %v977
    %v1275 = vpack.c.b16 %v980, %v979
    %v1276 = vpack.c.b16 %v982, %v981
    %v1277 = vpack.c.b16 %v984, %v983
    %v1278 = vpack.c.b16 %v986, %v985
    %v1279 = vpack.c.b16 %v988, %v987
    %v1280 = vpack.c.b16 %v990, %v989
    %v1281 = vpack.c.b16 %v992, %v991
    %v1282 = vpack.c.b16 %v994, %v993
    %v1283 = vpack.c.b16 %v996, %v995
    %v1284 = vpack.c.b16 %v998, %v997
    %v1285 = vpack.c.b16 %v1000, %v999
    %v1286 = vpack.c.b16 %v1002, %v1001
    %v1287 = vpack.c.b16 %v1004, %v1003
    %v1288 = vpack.c.b16 %v1006, %v1005
    %v1289 = vpack.c.b16 %v1008, %v1007
    %v1290 = vpack.c.b16 %v1010, %v1009
    %v1291 = vpack.c.b16 %v1012, %v1011
    %v1292 = vpack.c.b16 %v1014, %v1013
    %v1293 = vpack.c.b16 %v1016, %v1015
    %v1294 = vpack.c.b16 %v1018, %v1017
    %v1295 = vpack.c.b16 %v1020, %v1019
    %v1296 = vpack.c.b16 %v1022, %v1021
    %v1297 = vpack.c.b16 %v1024, %v1023
    %v1298 = vpack.c.b16 %v1026, %v1025
    %v1299 = vpack.c.b16 %v1028, %v1027
    %v1300 = vpack.c.b16 %v1030, %v1029
    %v1301 = vpack.c.b16 %v1032, %v1031
    %v1302 = vpack.c.b16 %v1034, %v1033
    %v1303 = vpack.c.b16 %v1036, %v1035
    %v1304 = vpack.c.b16 %v1038, %v1037
    %v1305 = vpack.c.b16 %v1040, %v1039
    %v1306 = vpack.c.b16 %v1042, %v1041
    %v1307 = vpack.c.b16 %v1044, %v1043
    %v1308 = vpack.c.b16 %v1046, %v1045
    %v1309 = vpack.c.b16 %v1048, %v1047
    %v1310 = vpack.c.b16 %v1050, %v1049
    %v1311 = vpack.c.b16 %v1052, %v1051
    %v1312 = vpack.c.b16 %v1054, %v1053
    %v1313 = vpack.c.b16 %v1056, %v1055
    %v1314 = vpack.c.b16 %v1058, %v1057
    %v1315 = vpack.c.b16 %v1060, %v1059
    %v1316 = vpack.c.b16 %v1062, %v1061
    %v1317 = vpack.c.b16 %v1064, %v1063
    %v1318 = vpack.c.b16 %v1066, %v1065
    %v1319 = vpack.c.b16 %v1068, %v1067
    %v1320 = vpack.c.b16 %v1070, %v1069
    %v1321 = vpack.c.b16 %v1072, %v1071
    %v1322 = vpack.c.b16 %v1074, %v1073
    %v1323 = vpack.c.b16 %v1076, %v1075
    %v1324 = vpack.c.b16 %v1078, %v1077
    %v1325 = vpack.c.b16 %v1080, %v1079
    %v1326 = vpack.c.b16 %v1082, %v1081
    %v1327 = vpack.c.b16 %v1084, %v1083
    %v1328 = vpack.c.b16 %v1086, %v1085
    %v1329 = vpack.c.b16 %v1088, %v1087
    %v1330 = vpack.c.b16 %v1090, %v1089
    %v1331 = vpack.c.b16 %v1092, %v1091
    %v1332 = vpack.c.b16 %v1094, %v1093
    %v1333 = vpack.c.b16 %v1096, %v1095
    %v1334 = vpack.c.b16 %v1098, %v1097
    %v1335 = vpack.c.b16 %v1100, %v1099
    %v1336 = vpack.c.b16 %v1102, %v1101
    %v1337 = vpack.c.b16 %v1104, %v1103
    %v1338 = vpack.c.b16 %v1106, %v1105
    %v1339 = vpack.c.b16 %v1108, %v1107
    %v1340 = vpack.c.b16 %v1110, %v1109
    %v1341 = vpack.c.b16 %v1112, %v1111
    %v1342 = vpack.c.b16 %v1114, %v1113
    %v1343 = vpack.c.b16 %v1116, %v1115
    %v1344 = vpack.c.b16 %v1118, %v1117
    %v1345 = vpack.c.b16 %v1120, %v1119
    %v1346 = vpack.c.b16 %v1122, %v1121
    %v1347 = vpack.c.b16 %v1124, %v1123
    %v1348 = vpack.c.b16 %v1126, %v1125
    %v1349 = vpack.c.b16 %v1128, %v1127
    %v1350 = vpack.c.b16 %v1130, %v1129
    %v1351 = vpack.c.b16 %v1132, %v1131
    %v1352 = vpack.c.b16 %v1134, %v1133
    %v1353 = vpack.c.b16 %v1136, %v1135
    %v1354 = vpack.c.b16 %v1138, %v1137
    %v1355 = vpack.c.b16 %v1140, %v1139
    %v1356 = vpack.c.b16 %v1142, %v1141
    %v1357 = vpack.c.b16 %v1144, %v1143
    %v1358 = vpack.c.b16 %v1146, %v1145
    %v1359 = vpack.c.b16 %v1148, %v1147
    %v1360 = vpack.c.b16 %v1150, %v1149
    %v1361 = vpack.c.b16 %v1152, %v1151
    %v1362 = vpack.c.b16 %v1154, %v1153
    %v1363 = vpack.c.b16 %v1156, %v1155
    %v1364 = vpack.c.b16 %v1158, %v1157
    %v1365 = vpack.c.b16 %v1160, %v1159
    %v1366 = vpack.c.b16 %v1162, %v1161
    %v1367 = vpack.c.b16 %v1164, %v1163
    %v1368 = vpack.c.b16 %v1166, %v1165
    %v1369 = vpack.c.b16 %v1168, %v1167
    %v1370 = vpack.c.b16 %v1170, %v1169
    %v1371 = vpack.c.b16 %v1172, %v1171
    %v1372 = vpack.c.b16 %v1174, %v1173
    %v1373 = vpack.c.b16 %v1176, %v1175
    %v1374 = vpack.c.b16 %v1178, %v1177
    %v1375 = vpack.c.b16 %v1180, %v1179
    %v1376 = vpack.c.b16 %v1182, %v1181
    %v1377 = vpack.c.b16 %v1184, %v1183
    %v1378 = vpack.c.b16 %v1186, %v1185
    %v1379 = vpack.c.b16 %v1188, %v1187
    %v1380 = vpack.c.b16 %v1190, %v1189
    %v1381 = vpack.c.b16 %v1192, %v1191
    %v1382 = vpack.c.b16 %v1194, %v1193
    %v1383 = vpack.c.b16 %v1196, %v1195
    %v1384 = vpack.c.b16 %v1198, %v1197
    %v1385 = vpack.c.b16 %v1200, %v1199
    %v1386 = vpack.c.b16 %v1202, %v1201
    %v1387 = vpack.c.b16 %v1204, %v1203
    %v1388 = vpack.c.b16 %v1206, %v1205
    %v1389 = vpack.c.b16 %v1208, %v1207
    %v1390 = vpack.c.b16 %v1210, %v1209
    %v1391 = vpack.c.b16 %v1212, %v1211
    %v1392 = vpack.c.b16 %v1214, %v1213
    %v1393 = vpack.c.b16 %v1216, %v1215
    %v1394 = vpack.c.b16 %v1218, %v1217
    %v1395 = vpack.c.b16 %v1220, %v1219
    %v1396 = vpack.c.b16 %v1222, %v1221
    %v1397 = vpack.c.b16 %v1224, %v1223
    %v1398 = vpack.c.b16 %v1226, %v1225
    %v1399 = vpack.c.b16 %v1228, %v1227
    %v1400 = vpack.c.b16 %v1230, %v1229
    %v1401 = vpack.c.b16 %v1232, %v1231
    %v1402 = vpack.c.b16 %v1234, %v1233
    %1571 = vmatprep.subr.bf16.mxu0 0
    %1572 = vmatpush1.bf16.msra.mxu0 %v1242
    %1573 = vmatprep.subr.bf16.mxu0 0
    %1574 = vmatpush1.bf16.msra.mxu0 %v1241
    %1575 = vmatprep.subr.bf16.mxu0 0
    %1576 = vmatpush1.bf16.msra.mxu0 %v1240
    %1577 = vmatprep.subr.bf16.mxu0 0
    %1578 = vmatpush1.bf16.msra.mxu0 %v1239
    %1579 = vmatprep.subr.bf16.mxu0 0
    %1580 = vmatpush1.bf16.msra.mxu0 %v1238
    %1581 = vmatprep.subr.bf16.mxu0 0
    %1582 = vmatpush1.bf16.msra.mxu0 %v1237
    %1583 = vmatprep.subr.bf16.mxu0 0
    %1584 = vmatpush1.bf16.msra.mxu0 %v1236
    %1585 = vmatprep.subr.bf16.mxu0 0
    %1586 = vmatpush1.bf16.msra.mxu0 %v1235
    %1587 = vmatprep.subr.bf16.mxu0 0
    %1588 = vmatpush2.bf16.msra.mxu0 %v1250
    %1589 = vmatprep.subr.bf16.mxu0 0
    %1590 = vmatpush2.bf16.msra.mxu0 %v1249
    %1591 = vmatprep.subr.bf16.mxu0 0
    %1592 = vmatpush2.bf16.msra.mxu0 %v1248
    %1593 = vmatprep.subr.bf16.mxu0 0
    %1594 = vmatpush2.bf16.msra.mxu0 %v1247
    %1595 = vmatprep.subr.bf16.mxu0 0
    %1596 = vmatpush2.bf16.msra.mxu0 %v1246
    %1597 = vmatprep.subr.bf16.mxu0 0
    %1598 = vmatpush2.bf16.msra.mxu0 %v1245
    %1599 = vmatprep.subr.bf16.mxu0 0
    %1600 = vmatpush2.bf16.msra.mxu0 %v1244
    %1601 = vmatprep.subr.bf16.mxu0 0
    %1602 = vmatpush2.bf16.msra.mxu0 %v1243
    %1603 = vmatprep.mubr.bf16.mxu0 %v442
    %1604 = vmatmul.mubr.bf16.gmra.mxu0 %v428
    %v1605 = vpop.f32.mrf.mxu0
    %v1606 = vadd.f32 %v62, %v1605
    %v1607 = vpop.f32.mrf.mxu0
    %v1608 = vpop.f32.mrf.mxu0
    %v1609 = vpop.f32.mrf.mxu0
    %1610 = vdwg.mxu0
    %1611 = vmatprep.subr.bf16.mxu0 0
    %1612 = vmatpush1.bf16.msra.mxu0 %v1258
    %1613 = vmatprep.subr.bf16.mxu0 0
    %1614 = vmatpush1.bf16.msra.mxu0 %v1257
    %1615 = vmatprep.subr.bf16.mxu0 0
    %1616 = vmatpush1.bf16.msra.mxu0 %v1256
    %1617 = vmatprep.subr.bf16.mxu0 0
    %1618 = vmatpush1.bf16.msra.mxu0 %v1255
    %1619 = vmatprep.subr.bf16.mxu0 0
    %1620 = vmatpush1.bf16.msra.mxu0 %v1254
    %1621 = vmatprep.subr.bf16.mxu0 0
    %1622 = vmatpush1.bf16.msra.mxu0 %v1253
    %1623 = vmatprep.subr.bf16.mxu0 0
    %1624 = vmatpush1.bf16.msra.mxu0 %v1252
    %1625 = vmatprep.subr.bf16.mxu0 0
    %1626 = vmatpush1.bf16.msra.mxu0 %v1251
    %1627 = vmatprep.subr.bf16.mxu0 0
    %1628 = vmatpush2.bf16.msra.mxu0 %v1266
    %1629 = vmatprep.subr.bf16.mxu0 0
    %1630 = vmatpush2.bf16.msra.mxu0 %v1265
    %1631 = vmatprep.subr.bf16.mxu0 0
    %1632 = vmatpush2.bf16.msra.mxu0 %v1264
    %1633 = vmatprep.subr.bf16.mxu0 0
    %1634 = vmatpush2.bf16.msra.mxu0 %v1263
    %1635 = vmatprep.subr.bf16.mxu0 0
    %1636 = vmatpush2.bf16.msra.mxu0 %v1262
    %1637 = vmatprep.subr.bf16.mxu0 0
    %1638 = vmatpush2.bf16.msra.mxu0 %v1261
    %1639 = vmatprep.subr.bf16.mxu0 0
    %1640 = vmatpush2.bf16.msra.mxu0 %v1260
    %1641 = vmatprep.subr.bf16.mxu0 0
    %1642 = vmatpush2.bf16.msra.mxu0 %v1259
    %1643 = vmatprep.mubr.bf16.mxu0 %v452
    %1644 = vmatmul.mubr.bf16.gmra.mxu0 %v450
    %v1645 = vpop.f32.mrf.mxu0
    %v1646 = vadd.f32 %v1606, %v1645
    %v1647 = vpop.f32.mrf.mxu0
    %v1648 = vpop.f32.mrf.mxu0
    %v1649 = vpop.f32.mrf.mxu0
    %1650 = vdwg.mxu0
    %1651 = vmatprep.subr.bf16.mxu0 0
    %1652 = vmatpush1.bf16.msra.mxu0 %v1274
    %1653 = vmatprep.subr.bf16.mxu0 0
    %1654 = vmatpush1.bf16.msra.mxu0 %v1273
    %1655 = vmatprep.subr.bf16.mxu0 0
    %1656 = vmatpush1.bf16.msra.mxu0 %v1272
    %1657 = vmatprep.subr.bf16.mxu0 0
    %1658 = vmatpush1.bf16.msra.mxu0 %v1271
    %1659 = vmatprep.subr.bf16.mxu0 0
    %1660 = vmatpush1.bf16.msra.mxu0 %v1270
    %1661 = vmatprep.subr.bf16.mxu0 0
    %1662 = vmatpush1.bf16.msra.mxu0 %v1269
    %1663 = vmatprep.subr.bf16.mxu0 0
    %1664 = vmatpush1.bf16.msra.mxu0 %v1268
    %1665 = vmatprep.subr.bf16.mxu0 0
    %1666 = vmatpush1.bf16.msra.mxu0 %v1267
    %1667 = vmatprep.subr.bf16.mxu0 0
    %1668 = vmatpush2.bf16.msra.mxu0 %v1282
    %1669 = vmatprep.subr.bf16.mxu0 0
    %1670 = vmatpush2.bf16.msra.mxu0 %v1281
    %1671 = vmatprep.subr.bf16.mxu0 0
    %1672 = vmatpush2.bf16.msra.mxu0 %v1280
    %1673 = vmatprep.subr.bf16.mxu0 0
    %1674 = vmatpush2.bf16.msra.mxu0 %v1279
    %1675 = vmatprep.subr.bf16.mxu0 0
    %1676 = vmatpush2.bf16.msra.mxu0 %v1278
    %1677 = vmatprep.subr.bf16.mxu0 0
    %1678 = vmatpush2.bf16.msra.mxu0 %v1277
    %1679 = vmatprep.subr.bf16.mxu0 0
    %1680 = vmatpush2.bf16.msra.mxu0 %v1276
    %1681 = vmatprep.subr.bf16.mxu0 0
    %1682 = vmatpush2.bf16.msra.mxu0 %v1275
    %1683 = vmatprep.mubr.bf16.mxu0 %v449
    %1684 = vmatmul.mubr.bf16.gmra.mxu0 %v435
    %v1685 = vpop.f32.mrf.mxu0
    %v1686 = vadd.f32 %v1646, %v1685
    %v1687 = vpop.f32.mrf.mxu0
    %v1688 = vpop.f32.mrf.mxu0
    %v1689 = vpop.f32.mrf.mxu0
    %1690 = vdwg.mxu0
    %1691 = vmatprep.subr.bf16.mxu0 0
    %1692 = vmatpush1.bf16.msra.mxu0 %v1290
    %1693 = vmatprep.subr.bf16.mxu0 0
    %1694 = vmatpush1.bf16.msra.mxu0 %v1289
    %1695 = vmatprep.subr.bf16.mxu0 0
    %1696 = vmatpush1.bf16.msra.mxu0 %v1288
    %1697 = vmatprep.subr.bf16.mxu0 0
    %1698 = vmatpush1.bf16.msra.mxu0 %v1287
    %1699 = vmatprep.subr.bf16.mxu0 0
    %1700 = vmatpush1.bf16.msra.mxu0 %v1286
    %1701 = vmatprep.subr.bf16.mxu0 0
    %1702 = vmatpush1.bf16.msra.mxu0 %v1285
    %1703 = vmatprep.subr.bf16.mxu0 0
    %1704 = vmatpush1.bf16.msra.mxu0 %v1284
    %1705 = vmatprep.subr.bf16.mxu0 0
    %1706 = vmatpush1.bf16.msra.mxu0 %v1283
    %1707 = vmatprep.subr.bf16.mxu0 0
    %1708 = vmatpush2.bf16.msra.mxu0 %v1298
    %1709 = vmatprep.subr.bf16.mxu0 0
    %1710 = vmatpush2.bf16.msra.mxu0 %v1297
    %1711 = vmatprep.subr.bf16.mxu0 0
    %1712 = vmatpush2.bf16.msra.mxu0 %v1296
    %1713 = vmatprep.subr.bf16.mxu0 0
    %1714 = vmatpush2.bf16.msra.mxu0 %v1295
    %1715 = vmatprep.subr.bf16.mxu0 0
    %1716 = vmatpush2.bf16.msra.mxu0 %v1294
    %1717 = vmatprep.subr.bf16.mxu0 0
    %1718 = vmatpush2.bf16.msra.mxu0 %v1293
    %1719 = vmatprep.subr.bf16.mxu0 0
    %1720 = vmatpush2.bf16.msra.mxu0 %v1292
    %1721 = vmatprep.subr.bf16.mxu0 0
    %1722 = vmatpush2.bf16.msra.mxu0 %v1291
    %1723 = vmatprep.mubr.bf16.mxu0 %v453
    %1724 = vmatmul.mubr.bf16.gmra.mxu0 %v451
    %v1725 = vpop.f32.mrf.mxu0
    %v1726 = vadd.f32 %v1686, %v1725
    %v1727 = vpop.f32.mrf.mxu0
    %v1728 = vpop.f32.mrf.mxu0
    %v1729 = vpop.f32.mrf.mxu0
    %1730 = vdwg.mxu0
    %1731 = vmatprep.subr.bf16.mxu0 0
    %1732 = vmatpush1.bf16.msra.mxu0 %v1306
    %1733 = vmatprep.subr.bf16.mxu0 0
    %1734 = vmatpush1.bf16.msra.mxu0 %v1305
    %1735 = vmatprep.subr.bf16.mxu0 0
    %1736 = vmatpush1.bf16.msra.mxu0 %v1304
    %1737 = vmatprep.subr.bf16.mxu0 0
    %1738 = vmatpush1.bf16.msra.mxu0 %v1303
    %1739 = vmatprep.subr.bf16.mxu0 0
    %1740 = vmatpush1.bf16.msra.mxu0 %v1302
    %1741 = vmatprep.subr.bf16.mxu0 0
    %1742 = vmatpush1.bf16.msra.mxu0 %v1301
    %1743 = vmatprep.subr.bf16.mxu0 0
    %1744 = vmatpush1.bf16.msra.mxu0 %v1300
    %1745 = vmatprep.subr.bf16.mxu0 0
    %1746 = vmatpush1.bf16.msra.mxu0 %v1299
    %1747 = vmatprep.subr.bf16.mxu0 0
    %1748 = vmatpush2.bf16.msra.mxu0 %v1314
    %1749 = vmatprep.subr.bf16.mxu0 0
    %1750 = vmatpush2.bf16.msra.mxu0 %v1313
    %1751 = vmatprep.subr.bf16.mxu0 0
    %1752 = vmatpush2.bf16.msra.mxu0 %v1312
    %1753 = vmatprep.subr.bf16.mxu0 0
    %1754 = vmatpush2.bf16.msra.mxu0 %v1311
    %1755 = vmatprep.subr.bf16.mxu0 0
    %1756 = vmatpush2.bf16.msra.mxu0 %v1310
    %1757 = vmatprep.subr.bf16.mxu0 0
    %1758 = vmatpush2.bf16.msra.mxu0 %v1309
    %1759 = vmatprep.subr.bf16.mxu0 0
    %1760 = vmatpush2.bf16.msra.mxu0 %v1308
    %1761 = vmatprep.subr.bf16.mxu0 0
    %1762 = vmatpush2.bf16.msra.mxu0 %v1307
    %1763 = vmatprep.mubr.bf16.mxu0 %v491
    %1764 = vmatmul.mubr.bf16.gmra.mxu0 %v477
    %v1765 = vpop.f32.mrf.mxu0
    %v1766 = vadd.f32 %v1726, %v1765
    %v1767 = vpop.f32.mrf.mxu0
    %v1768 = vpop.f32.mrf.mxu0
    %v1769 = vpop.f32.mrf.mxu0
    %1770 = vdwg.mxu0
    %1771 = vmatprep.subr.bf16.mxu0 0
    %1772 = vmatpush1.bf16.msra.mxu0 %v1322
    %1773 = vmatprep.subr.bf16.mxu0 0
    %1774 = vmatpush1.bf16.msra.mxu0 %v1321
    %1775 = vmatprep.subr.bf16.mxu0 0
    %1776 = vmatpush1.bf16.msra.mxu0 %v1320
    %1777 = vmatprep.subr.bf16.mxu0 0
    %1778 = vmatpush1.bf16.msra.mxu0 %v1319
    %1779 = vmatprep.subr.bf16.mxu0 0
    %1780 = vmatpush1.bf16.msra.mxu0 %v1318
    %1781 = vmatprep.subr.bf16.mxu0 0
    %1782 = vmatpush1.bf16.msra.mxu0 %v1317
    %1783 = vmatprep.subr.bf16.mxu0 0
    %1784 = vmatpush1.bf16.msra.mxu0 %v1316
    %1785 = vmatprep.subr.bf16.mxu0 0
    %1786 = vmatpush1.bf16.msra.mxu0 %v1315
    %1787 = vmatprep.subr.bf16.mxu0 0
    %1788 = vmatpush2.bf16.msra.mxu0 %v1330
    %1789 = vmatprep.subr.bf16.mxu0 0
    %1790 = vmatpush2.bf16.msra.mxu0 %v1329
    %1791 = vmatprep.subr.bf16.mxu0 0
    %1792 = vmatpush2.bf16.msra.mxu0 %v1328
    %1793 = vmatprep.subr.bf16.mxu0 0
    %1794 = vmatpush2.bf16.msra.mxu0 %v1327
    %1795 = vmatprep.subr.bf16.mxu0 0
    %1796 = vmatpush2.bf16.msra.mxu0 %v1326
    %1797 = vmatprep.subr.bf16.mxu0 0
    %1798 = vmatpush2.bf16.msra.mxu0 %v1325
    %1799 = vmatprep.subr.bf16.mxu0 0
    %1800 = vmatpush2.bf16.msra.mxu0 %v1324
    %1801 = vmatprep.subr.bf16.mxu0 0
    %1802 = vmatpush2.bf16.msra.mxu0 %v1323
    %1803 = vmatprep.mubr.bf16.mxu0 %v501
    %1804 = vmatmul.mubr.bf16.gmra.mxu0 %v499
    %v1805 = vpop.f32.mrf.mxu0
    %v1806 = vadd.f32 %v1766, %v1805
    %v1807 = vpop.f32.mrf.mxu0
    %v1808 = vpop.f32.mrf.mxu0
    %v1809 = vpop.f32.mrf.mxu0
    %1810 = vdwg.mxu0
    %1811 = vmatprep.subr.bf16.mxu0 0
    %1812 = vmatpush1.bf16.msra.mxu0 %v1338
    %1813 = vmatprep.subr.bf16.mxu0 0
    %1814 = vmatpush1.bf16.msra.mxu0 %v1337
    %1815 = vmatprep.subr.bf16.mxu0 0
    %1816 = vmatpush1.bf16.msra.mxu0 %v1336
    %1817 = vmatprep.subr.bf16.mxu0 0
    %1818 = vmatpush1.bf16.msra.mxu0 %v1335
    %1819 = vmatprep.subr.bf16.mxu0 0
    %1820 = vmatpush1.bf16.msra.mxu0 %v1334
    %1821 = vmatprep.subr.bf16.mxu0 0
    %1822 = vmatpush1.bf16.msra.mxu0 %v1333
    %1823 = vmatprep.subr.bf16.mxu0 0
    %1824 = vmatpush1.bf16.msra.mxu0 %v1332
    %1825 = vmatprep.subr.bf16.mxu0 0
    %1826 = vmatpush1.bf16.msra.mxu0 %v1331
    %1827 = vmatprep.subr.bf16.mxu0 0
    %1828 = vmatpush2.bf16.msra.mxu0 %v1346
    %1829 = vmatprep.subr.bf16.mxu0 0
    %1830 = vmatpush2.bf16.msra.mxu0 %v1345
    %1831 = vmatprep.subr.bf16.mxu0 0
    %1832 = vmatpush2.bf16.msra.mxu0 %v1344
    %1833 = vmatprep.subr.bf16.mxu0 0
    %1834 = vmatpush2.bf16.msra.mxu0 %v1343
    %1835 = vmatprep.subr.bf16.mxu0 0
    %1836 = vmatpush2.bf16.msra.mxu0 %v1342
    %1837 = vmatprep.subr.bf16.mxu0 0
    %1838 = vmatpush2.bf16.msra.mxu0 %v1341
    %1839 = vmatprep.subr.bf16.mxu0 0
    %1840 = vmatpush2.bf16.msra.mxu0 %v1340
    %1841 = vmatprep.subr.bf16.mxu0 0
    %1842 = vmatpush2.bf16.msra.mxu0 %v1339
    %1843 = vmatprep.mubr.bf16.mxu0 %v498
    %1844 = vmatmul.mubr.bf16.gmra.mxu0 %v484
    %v1845 = vpop.f32.mrf.mxu0
    %v1846 = vadd.f32 %v1806, %v1845
    %v1847 = vpop.f32.mrf.mxu0
    %v1848 = vpop.f32.mrf.mxu0
    %v1849 = vpop.f32.mrf.mxu0
    %1850 = vdwg.mxu0
    %1851 = vmatprep.subr.bf16.mxu0 0
    %1852 = vmatpush1.bf16.msra.mxu0 %v1354
    %1853 = vmatprep.subr.bf16.mxu0 0
    %1854 = vmatpush1.bf16.msra.mxu0 %v1353
    %1855 = vmatprep.subr.bf16.mxu0 0
    %1856 = vmatpush1.bf16.msra.mxu0 %v1352
    %1857 = vmatprep.subr.bf16.mxu0 0
    %1858 = vmatpush1.bf16.msra.mxu0 %v1351
    %1859 = vmatprep.subr.bf16.mxu0 0
    %1860 = vmatpush1.bf16.msra.mxu0 %v1350
    %1861 = vmatprep.subr.bf16.mxu0 0
    %1862 = vmatpush1.bf16.msra.mxu0 %v1349
    %1863 = vmatprep.subr.bf16.mxu0 0
    %1864 = vmatpush1.bf16.msra.mxu0 %v1348
    %1865 = vmatprep.subr.bf16.mxu0 0
    %1866 = vmatpush1.bf16.msra.mxu0 %v1347
    %1867 = vmatprep.subr.bf16.mxu0 0
    %1868 = vmatpush2.bf16.msra.mxu0 %v1362
    %1869 = vmatprep.subr.bf16.mxu0 0
    %1870 = vmatpush2.bf16.msra.mxu0 %v1361
    %1871 = vmatprep.subr.bf16.mxu0 0
    %1872 = vmatpush2.bf16.msra.mxu0 %v1360
    %1873 = vmatprep.subr.bf16.mxu0 0
    %1874 = vmatpush2.bf16.msra.mxu0 %v1359
    %1875 = vmatprep.subr.bf16.mxu0 0
    %1876 = vmatpush2.bf16.msra.mxu0 %v1358
    %1877 = vmatprep.subr.bf16.mxu0 0
    %1878 = vmatpush2.bf16.msra.mxu0 %v1357
    %1879 = vmatprep.subr.bf16.mxu0 0
    %1880 = vmatpush2.bf16.msra.mxu0 %v1356
    %1881 = vmatprep.subr.bf16.mxu0 0
    %1882 = vmatpush2.bf16.msra.mxu0 %v1355
    %1883 = vmatprep.mubr.bf16.mxu0 %v502
    %1884 = vmatmul.mubr.bf16.gmra.mxu0 %v500
    %v1885 = vpop.f32.mrf.mxu0
    %v1886 = vadd.f32 %v1846, %v1885
    %v1887 = vpop.f32.mrf.mxu0
    %v1888 = vpop.f32.mrf.mxu0
    %v1889 = vpop.f32.mrf.mxu0
    %1890 = vdwg.mxu0
    %1891 = vmatprep.subr.bf16.mxu0 0
    %1892 = vmatpush1.bf16.msra.mxu0 %v1370
    %1893 = vmatprep.subr.bf16.mxu0 0
    %1894 = vmatpush1.bf16.msra.mxu0 %v1369
    %1895 = vmatprep.subr.bf16.mxu0 0
    %1896 = vmatpush1.bf16.msra.mxu0 %v1368
    %1897 = vmatprep.subr.bf16.mxu0 0
    %1898 = vmatpush1.bf16.msra.mxu0 %v1367
    %1899 = vmatprep.subr.bf16.mxu0 0
    %1900 = vmatpush1.bf16.msra.mxu0 %v1366
    %1901 = vmatprep.subr.bf16.mxu0 0
    %1902 = vmatpush1.bf16.msra.mxu0 %v1365
    %1903 = vmatprep.subr.bf16.mxu0 0
    %1904 = vmatpush1.bf16.msra.mxu0 %v1364
    %1905 = vmatprep.subr.bf16.mxu0 0
    %1906 = vmatpush1.bf16.msra.mxu0 %v1363
    %1907 = vmatprep.subr.bf16.mxu0 0
    %1908 = vmatpush2.bf16.msra.mxu0 %v1378
    %1909 = vmatprep.subr.bf16.mxu0 0
    %1910 = vmatpush2.bf16.msra.mxu0 %v1377
    %1911 = vmatprep.subr.bf16.mxu0 0
    %1912 = vmatpush2.bf16.msra.mxu0 %v1376
    %1913 = vmatprep.subr.bf16.mxu0 0
    %1914 = vmatpush2.bf16.msra.mxu0 %v1375
    %1915 = vmatprep.subr.bf16.mxu0 0
    %1916 = vmatpush2.bf16.msra.mxu0 %v1374
    %1917 = vmatprep.subr.bf16.mxu0 0
    %1918 = vmatpush2.bf16.msra.mxu0 %v1373
    %1919 = vmatprep.subr.bf16.mxu0 0
    %1920 = vmatpush2.bf16.msra.mxu0 %v1372
    %1921 = vmatprep.subr.bf16.mxu0 0
    %1922 = vmatpush2.bf16.msra.mxu0 %v1371
    %1923 = vmatprep.mubr.bf16.mxu0 %v539
    %1924 = vmatmul.mubr.bf16.gmra.mxu0 %v525
    %v1925 = vpop.f32.mrf.mxu0
    %v1926 = vadd.f32 %v1886, %v1925
    %v1927 = vpop.f32.mrf.mxu0
    %v1928 = vpop.f32.mrf.mxu0
    %v1929 = vpop.f32.mrf.mxu0
    %1930 = vdwg.mxu0
    %1931 = vmatprep.subr.bf16.mxu0 0
    %1932 = vmatpush1.bf16.msra.mxu0 %v1386
    %1933 = vmatprep.subr.bf16.mxu0 0
    %1934 = vmatpush1.bf16.msra.mxu0 %v1385
    %1935 = vmatprep.subr.bf16.mxu0 0
    %1936 = vmatpush1.bf16.msra.mxu0 %v1384
    %1937 = vmatprep.subr.bf16.mxu0 0
    %1938 = vmatpush1.bf16.msra.mxu0 %v1383
    %1939 = vmatprep.subr.bf16.mxu0 0
    %1940 = vmatpush1.bf16.msra.mxu0 %v1382
    %1941 = vmatprep.subr.bf16.mxu0 0
    %1942 = vmatpush1.bf16.msra.mxu0 %v1381
    %1943 = vmatprep.subr.bf16.mxu0 0
    %1944 = vmatpush1.bf16.msra.mxu0 %v1380
    %1945 = vmatprep.subr.bf16.mxu0 0
    %1946 = vmatpush1.bf16.msra.mxu0 %v1379
    %1947 = vmatprep.subr.bf16.mxu0 0
    %1948 = vmatpush2.bf16.msra.mxu0 %v1394
    %1949 = vmatprep.subr.bf16.mxu0 0
    %1950 = vmatpush2.bf16.msra.mxu0 %v1393
    %1951 = vmatprep.subr.bf16.mxu0 0
    %1952 = vmatpush2.bf16.msra.mxu0 %v1392
    %1953 = vmatprep.subr.bf16.mxu0 0
    %1954 = vmatpush2.bf16.msra.mxu0 %v1391
    %1955 = vmatprep.subr.bf16.mxu0 0
    %1956 = vmatpush2.bf16.msra.mxu0 %v1390
    %1957 = vmatprep.subr.bf16.mxu0 0
    %1958 = vmatpush2.bf16.msra.mxu0 %v1389
    %1959 = vmatprep.subr.bf16.mxu0 0
    %1960 = vmatpush2.bf16.msra.mxu0 %v1388
    %1961 = vmatprep.subr.bf16.mxu0 0
    %1962 = vmatpush2.bf16.msra.mxu0 %v1387
    %1963 = vmatprep.mubr.bf16.mxu0 %v541
    %1964 = vmatmul.mubr.bf16.gmra.mxu0 %v540
    %v1965 = vpop.f32.mrf.mxu0
    %v1966 = vadd.f32 %v1926, %v1965
    %v1967 = vpop.f32.mrf.mxu0
    %v1968 = vpop.f32.mrf.mxu0
    %v1969 = vpop.f32.mrf.mxu0
    %1970 = vdwg.mxu0
    %1971 = vmatprep.subr.bf16.mxu0 0
    %1972 = vmatpush1.bf16.msra.mxu0 %v1402
    %1973 = vmatprep.subr.bf16.mxu0 0
    %1974 = vmatpush1.bf16.msra.mxu0 %v1401
    %1975 = vmatprep.subr.bf16.mxu0 0
    %1976 = vmatpush1.bf16.msra.mxu0 %v1400
    %1977 = vmatprep.subr.bf16.mxu0 0
    %1978 = vmatpush1.bf16.msra.mxu0 %v1399
    %1979 = vmatprep.subr.bf16.mxu0 0
    %1980 = vmatpush1.bf16.msra.mxu0 %v1398
    %1981 = vmatprep.subr.bf16.mxu0 0
    %1982 = vmatpush1.bf16.msra.mxu0 %v1397
    %1983 = vmatprep.subr.bf16.mxu0 0
    %1984 = vmatpush1.bf16.msra.mxu0 %v1396
    %1985 = vmatprep.subr.bf16.mxu0 0
    %1986 = vmatpush1.bf16.msra.mxu0 %v1395
    %1987 = vmatprep.subr.bf16.mxu0 0
    %1988 = vmatpush2.bf16.msra.mxu0 0
    %1989 = vmatprep.subr.bf16.mxu0 0
    %1990 = vmatpush2.bf16.msra.mxu0 0
    %1991 = vmatprep.subr.bf16.mxu0 0
    %1992 = vmatpush2.bf16.msra.mxu0 0
    %1993 = vmatprep.subr.bf16.mxu0 0
    %1994 = vmatpush2.bf16.msra.mxu0 0
    %1995 = vmatprep.subr.bf16.mxu0 0
    %1996 = vmatpush2.bf16.msra.mxu0 0
    %1997 = vmatprep.subr.bf16.mxu0 0
    %1998 = vmatpush2.bf16.msra.mxu0 0
    %1999 = vmatprep.subr.bf16.mxu0 0
    %2000 = vmatpush2.bf16.msra.mxu0 0
    %2001 = vmatprep.subr.bf16.mxu0 0
    %2002 = vmatpush2.bf16.msra.mxu0 0
    %2003 = vmatprep.mubr.bf16.mxu0 0
    %2004 = vmatmul.mubr.bf16.gmra.mxu0 %v532
    %v2005 = vpop.f32.mrf.mxu0
    %v2006 = vadd.f32 %v1966, %v2005
    %v2007 = vpop.f32.mrf.mxu0
    %v2008 = vpop.f32.mrf.mxu0
    %v2009 = vpop.f32.mrf.mxu0
    %2010 = vdwg.mxu0
    %vm2011 = vcmp.gt.f32.partialorder %v2006, 20.0
    %v2012 = vmin.f32 %v2006, 20.0
    %v2013 = vmul.f32 %v2012, 1.442695
    %v2014 = vpow.pop %v2013
    %v2015 = vadd.f32 %v2014, 1.0
    %v2016 = vlog2.pop %v2015
    %v2017 = vmul.f32 %v2016, 0.6931472
    %v2018 = vmul.f32 -0.5, %v2014
    %v2019 = vadd.f32 %v2018, 1.0
    %v2020 = vmul.f32 %v2019, %v2014
    %v2021 = vand.u32 2147483647, %v2014
    %vm2022 = vcmp.lt.f32.partialorder %v2021, 0.0004427343
    %v2023 = vsel %vm2022, %v2020, %v2017
    %v2024 = vsel %vm2011, %v2006, %v2023
    %v2025 = vpack.c.bf16 %v2024, %v2024
    %v2026 = vld [vmem:[#allocation4] sm:$0xf]
    %v2027 = vld [vmem:[#allocation4 + $0x4] sm:$0xf]
    %v2028 = vld [vmem:[#allocation4 + $0x8] sm:$0xf]
    %v2029 = vld [vmem:[#allocation4 + $0xc] sm:$0xf]
    %v2030 = vld [vmem:[#allocation4 + $0x10] sm:$0xf]
    %v2031 = vld [vmem:[#allocation4 + $0x14] sm:$0xf]
    %v2032 = vld [vmem:[#allocation4 + $0x18] sm:$0xf]
    %v2033 = vld [vmem:[#allocation4 + $0x1c] sm:$0xf]
    %v2034 = vld [vmem:[#allocation4 + $0x20] sm:$0xf]
    %v2035 = vld [vmem:[#allocation4 + $0x24] sm:$0xf]
    %v2036 = vld [vmem:[#allocation4 + $0x28] sm:$0xf]
    %v2037 = vld [vmem:[#allocation4 + $0x2c] sm:$0xf]
    %v2038 = vld [vmem:[#allocation4 + $0x30] sm:$0xf]
    %v2039 = vld [vmem:[#allocation4 + $0x34] sm:$0xf]
    %v2040 = vld [vmem:[#allocation4 + $0x38] sm:$0xf]
    %v2041 = vld [vmem:[#allocation4 + $0x3c] sm:$0xf]
    %v2058 = vunpack.c.l.b16 %v2026
    %v2059 = vunpack.c.l.b16 %v2027
    %v2060 = vunpack.c.l.b16 %v2028
    %v2061 = vunpack.c.l.b16 %v2029
    %v2062 = vunpack.c.l.b16 %v2030
    %v2063 = vunpack.c.l.b16 %v2031
    %v2064 = vunpack.c.l.b16 %v2032
    %v2065 = vunpack.c.l.b16 %v2033
    %v2066 = vunpack.c.l.b16 %v2034
    %v2067 = vunpack.c.l.b16 %v2035
    %v2068 = vunpack.c.l.b16 %v2036
    %v2069 = vunpack.c.l.b16 %v2037
    %v2070 = vunpack.c.l.b16 %v2038
    %v2071 = vunpack.c.l.b16 %v2039
    %v2072 = vunpack.c.l.b16 %v2040
    %v2073 = vunpack.c.l.b16 %v2041
    %v2074 = vpack.c.b16 %v2059, %v2058
    %v2075 = vpack.c.b16 %v2061, %v2060
    %v2076 = vpack.c.b16 %v2063, %v2062
    %v2077 = vpack.c.b16 %v2065, %v2064
    %v2078 = vpack.c.b16 %v2067, %v2066
    %v2079 = vpack.c.b16 %v2069, %v2068
    %v2080 = vpack.c.b16 %v2071, %v2070
    %v2081 = vpack.c.b16 %v2073, %v2072
    %v2091 = vlaneseq
    %v2092 = vshrl.u32 %v2091, 7
    %v2093 = vsub.s32 1, %v2092
    %v2094 = vrot.slane %v62, %v2093
    %2096 = vmatprep.subr.bf16.mxu0 0
    %2097 = vmatpush1.bf16.msra.mxu0 %v2081
    %2098 = vmatprep.subr.bf16.mxu0 0
    %2099 = vmatpush1.bf16.msra.mxu0 %v2080
    %2100 = vmatprep.subr.bf16.mxu0 0
    %2101 = vmatpush1.bf16.msra.mxu0 %v2079
    %2102 = vmatprep.subr.bf16.mxu0 0
    %2103 = vmatpush1.bf16.msra.mxu0 %v2078
    %2104 = vmatprep.subr.bf16.mxu0 0
    %2105 = vmatpush1.bf16.msra.mxu0 %v2077
    %2106 = vmatprep.subr.bf16.mxu0 0
    %2107 = vmatpush1.bf16.msra.mxu0 %v2076
    %2108 = vmatprep.subr.bf16.mxu0 0
    %2109 = vmatpush1.bf16.msra.mxu0 %v2075
    %2110 = vmatprep.subr.bf16.mxu0 0
    %2111 = vmatpush1.bf16.msra.mxu0 %v2074
    %2112 = vmatprep.subr.bf16.mxu0 0
    %2113 = vmatpush2.bf16.msra.mxu0 0
    %2114 = vmatprep.subr.bf16.mxu0 0
    %2115 = vmatpush2.bf16.msra.mxu0 0
    %2116 = vmatprep.subr.bf16.mxu0 0
    %2117 = vmatpush2.bf16.msra.mxu0 0
    %2118 = vmatprep.subr.bf16.mxu0 0
    %2119 = vmatpush2.bf16.msra.mxu0 0
    %2120 = vmatprep.subr.bf16.mxu0 0
    %2121 = vmatpush2.bf16.msra.mxu0 0
    %2122 = vmatprep.subr.bf16.mxu0 0
    %2123 = vmatpush2.bf16.msra.mxu0 0
    %2124 = vmatprep.subr.bf16.mxu0 0
    %2125 = vmatpush2.bf16.msra.mxu0 0
    %2126 = vmatprep.subr.bf16.mxu0 0
    %2127 = vmatpush2.bf16.msra.mxu0 0
    %2128 = vmatprep.mubr.bf16.mxu0 0
    %2129 = vmatmul.mubr.bf16.gmra.mxu0 %v2025
    %v2130 = vpop.f32.mrf.mxu0
    %v2131 = vadd.f32 %v2094, %v2130
    %v2132 = vpop.f32.mrf.mxu0
    %v2133 = vpop.f32.mrf.mxu0
    %v2134 = vpop.f32.mrf.mxu0
    %2135 = vdwg.mxu0
    %vm2136 = vcmp.gt.f32.partialorder %v2131, 20.0
    %v2137 = vmin.f32 %v2131, 20.0
    %v2138 = vmul.f32 %v2137, 1.442695
    %v2139 = vpow.pop %v2138
    %v2140 = vadd.f32 %v2139, 1.0
    %v2141 = vlog2.pop %v2140
    %v2142 = vmul.f32 %v2141, 0.6931472
    %v2143 = vmul.f32 -0.5, %v2139
    %v2144 = vadd.f32 %v2143, 1.0
    %v2145 = vmul.f32 %v2144, %v2139
    %v2146 = vand.u32 2147483647, %v2139
    %vm2147 = vcmp.lt.f32.partialorder %v2146, 0.0004427343
    %v2148 = vsel %vm2147, %v2145, %v2142
    %v2149 = vsel %vm2136, %v2131, %v2148
    %v2150 = vpack.c.bf16 %v2149, %v2149
    %v2151 = vld [vmem:[#allocation6] sm:$0xff]
    %v2152 = vld [vmem:[#allocation6 + $0x8] sm:$0xf]
    %v2153 = vld [vmem:[#allocation6 + $0xc] sm:$0xff]
    %v2154 = vld [vmem:[#allocation6 + $0x14] sm:$0xf]
    %v2155 = vld [vmem:[#allocation6 + $0x18] sm:$0xff]
    %v2156 = vld [vmem:[#allocation6 + $0x20] sm:$0xf]
    %v2157 = vld [vmem:[#allocation6 + $0x24] sm:$0xff]
    %v2158 = vld [vmem:[#allocation6 + $0x2c] sm:$0xf]
    %v2159 = vld [vmem:[#allocation6 + $0x30] sm:$0xff]
    %v2160 = vld [vmem:[#allocation6 + $0x38] sm:$0xf]
    %v2161 = vld [vmem:[#allocation6 + $0x3c] sm:$0xff]
    %v2162 = vld [vmem:[#allocation6 + $0x44] sm:$0xf]
    %v2163 = vld [vmem:[#allocation6 + $0x48] sm:$0xff]
    %v2164 = vld [vmem:[#allocation6 + $0x50] sm:$0xf]
    %v2165 = vld [vmem:[#allocation6 + $0x54] sm:$0xff]
    %v2166 = vld [vmem:[#allocation6 + $0x5c] sm:$0xf]
    %v2167 = vld [vmem:[#allocation6 + $0x60] sm:$0xff]
    %v2168 = vld [vmem:[#allocation6 + $0x68] sm:$0xf]
    %v2169 = vld [vmem:[#allocation6 + $0x6c] sm:$0xff]
    %v2170 = vld [vmem:[#allocation6 + $0x74] sm:$0xf]
    %v2171 = vld [vmem:[#allocation6 + $0x78] sm:$0xff]
    %v2172 = vld [vmem:[#allocation6 + $0x80] sm:$0xf]
    %v2173 = vld [vmem:[#allocation6 + $0x84] sm:$0xff]
    %v2174 = vld [vmem:[#allocation6 + $0x8c] sm:$0xf]
    %v2175 = vld [vmem:[#allocation6 + $0x90] sm:$0xff]
    %v2176 = vld [vmem:[#allocation6 + $0x98] sm:$0xf]
    %v2177 = vld [vmem:[#allocation6 + $0x9c] sm:$0xff]
    %v2178 = vld [vmem:[#allocation6 + $0xa4] sm:$0xf]
    %v2179 = vld [vmem:[#allocation6 + $0xa8] sm:$0xff]
    %v2180 = vld [vmem:[#allocation6 + $0xb0] sm:$0xf]
    %v2181 = vld [vmem:[#allocation6 + $0xb4] sm:$0xff]
    %v2182 = vld [vmem:[#allocation6 + $0xbc] sm:$0xf]
    %v2215 = vunpack.c.l.b16 %v2151
    %v2216 = vunpack.c.h.b16 %v2151
    %v2217 = vunpack.c.l.b16 %v2152
    %v2218 = vunpack.c.l.b16 %v2153
    %v2219 = vunpack.c.h.b16 %v2153
    %v2220 = vunpack.c.l.b16 %v2154
    %v2221 = vunpack.c.l.b16 %v2155
    %v2222 = vunpack.c.h.b16 %v2155
    %v2223 = vunpack.c.l.b16 %v2156
    %v2224 = vunpack.c.l.b16 %v2157
    %v2225 = vunpack.c.h.b16 %v2157
    %v2226 = vunpack.c.l.b16 %v2158
    %v2227 = vunpack.c.l.b16 %v2159
    %v2228 = vunpack.c.h.b16 %v2159
    %v2229 = vunpack.c.l.b16 %v2160
    %v2230 = vunpack.c.l.b16 %v2161
    %v2231 = vunpack.c.h.b16 %v2161
    %v2232 = vunpack.c.l.b16 %v2162
    %v2233 = vunpack.c.l.b16 %v2163
    %v2234 = vunpack.c.h.b16 %v2163
    %v2235 = vunpack.c.l.b16 %v2164
    %v2236 = vunpack.c.l.b16 %v2165
    %v2237 = vunpack.c.h.b16 %v2165
    %v2238 = vunpack.c.l.b16 %v2166
    %v2239 = vunpack.c.l.b16 %v2167
    %v2240 = vunpack.c.h.b16 %v2167
    %v2241 = vunpack.c.l.b16 %v2168
    %v2242 = vunpack.c.l.b16 %v2169
    %v2243 = vunpack.c.h.b16 %v2169
    %v2244 = vunpack.c.l.b16 %v2170
    %v2245 = vunpack.c.l.b16 %v2171
    %v2246 = vunpack.c.h.b16 %v2171
    %v2247 = vunpack.c.l.b16 %v2172
    %v2248 = vunpack.c.l.b16 %v2173
    %v2249 = vunpack.c.h.b16 %v2173
    %v2250 = vunpack.c.l.b16 %v2174
    %v2251 = vunpack.c.l.b16 %v2175
    %v2252 = vunpack.c.h.b16 %v2175
    %v2253 = vunpack.c.l.b16 %v2176
    %v2254 = vunpack.c.l.b16 %v2177
    %v2255 = vunpack.c.h.b16 %v2177
    %v2256 = vunpack.c.l.b16 %v2178
    %v2257 = vunpack.c.l.b16 %v2179
    %v2258 = vunpack.c.h.b16 %v2179
    %v2259 = vunpack.c.l.b16 %v2180
    %v2260 = vunpack.c.l.b16 %v2181
    %v2261 = vunpack.c.h.b16 %v2181
    %v2262 = vunpack.c.l.b16 %v2182
    %v2263 = vpack.c.b16 %v2218, %v2215
    %v2264 = vpack.c.b16 %v2219, %v2216
    %v2265 = vpack.c.b16 %v2220, %v2217
    %v2266 = vpack.c.b16 %v2224, %v2221
    %v2267 = vpack.c.b16 %v2225, %v2222
    %v2268 = vpack.c.b16 %v2226, %v2223
    %v2269 = vpack.c.b16 %v2230, %v2227
    %v2270 = vpack.c.b16 %v2231, %v2228
    %v2271 = vpack.c.b16 %v2232, %v2229
    %v2272 = vpack.c.b16 %v2236, %v2233
    %v2273 = vpack.c.b16 %v2237, %v2234
    %v2274 = vpack.c.b16 %v2238, %v2235
    %v2275 = vpack.c.b16 %v2242, %v2239
    %v2276 = vpack.c.b16 %v2243, %v2240
    %v2277 = vpack.c.b16 %v2244, %v2241
    %v2278 = vpack.c.b16 %v2248, %v2245
    %v2279 = vpack.c.b16 %v2249, %v2246
    %v2280 = vpack.c.b16 %v2250, %v2247
    %v2281 = vpack.c.b16 %v2254, %v2251
    %v2282 = vpack.c.b16 %v2255, %v2252
    %v2283 = vpack.c.b16 %v2256, %v2253
    %v2284 = vpack.c.b16 %v2260, %v2257
    %v2285 = vpack.c.b16 %v2261, %v2258
    %v2286 = vpack.c.b16 %v2262, %v2259
    %v2311 = vlaneseq
    %v2312 = vshrl.u32 %v2311, 7
    %v2313 = vsub.s32 2, %v2312
    %v2314 = vrot.slane %v62, %v2313
    %v2315 = vlaneseq
    %v2316 = vshrl.u32 %v2315, 7
    %v2317 = vsub.s32 3, %v2316
    %v2318 = vrot.slane %v62, %v2317
    %v2319 = vlaneseq
    %v2320 = vshrl.u32 %v2319, 7
    %v2321 = vsub.s32 4, %v2320
    %v2322 = vrot.slane %v62, %v2321
    %2326 = vmatprep.subr.bf16.mxu0 %v2285
    %2327 = vmatpush1.bf16.msra.mxu0 %v2284
    %2328 = vmatprep.subr.bf16.mxu0 %v2282
    %2329 = vmatpush1.bf16.msra.mxu0 %v2281
    %2330 = vmatprep.subr.bf16.mxu0 %v2279
    %2331 = vmatpush1.bf16.msra.mxu0 %v2278
    %2332 = vmatprep.subr.bf16.mxu0 %v2276
    %2333 = vmatpush1.bf16.msra.mxu0 %v2275
    %2334 = vmatprep.subr.bf16.mxu0 %v2273
    %2335 = vmatpush1.bf16.msra.mxu0 %v2272
    %2336 = vmatprep.subr.bf16.mxu0 %v2270
    %2337 = vmatpush1.bf16.msra.mxu0 %v2269
    %2338 = vmatprep.subr.bf16.mxu0 %v2267
    %2339 = vmatpush1.bf16.msra.mxu0 %v2266
    %2340 = vmatprep.subr.bf16.mxu0 %v2264
    %2341 = vmatpush1.bf16.msra.mxu0 %v2263
    %2342 = vmatprep.subr.bf16.mxu0 0
    %2343 = vmatpush2.bf16.msra.mxu0 0
    %2344 = vmatprep.subr.bf16.mxu0 0
    %2345 = vmatpush2.bf16.msra.mxu0 0
    %2346 = vmatprep.subr.bf16.mxu0 0
    %2347 = vmatpush2.bf16.msra.mxu0 0
    %2348 = vmatprep.subr.bf16.mxu0 0
    %2349 = vmatpush2.bf16.msra.mxu0 0
    %2350 = vmatprep.subr.bf16.mxu0 0
    %2351 = vmatpush2.bf16.msra.mxu0 0
    %2352 = vmatprep.subr.bf16.mxu0 0
    %2353 = vmatpush2.bf16.msra.mxu0 0
    %2354 = vmatprep.subr.bf16.mxu0 0
    %2355 = vmatpush2.bf16.msra.mxu0 0
    %2356 = vmatprep.subr.bf16.mxu0 0
    %2357 = vmatpush2.bf16.msra.mxu0 0
    %2358 = vmatprep.mubr.bf16.mxu0 0
    %2359 = vmatmul.mubr.bf16.gmra.mxu0 %v2150
    %v2360 = vpop.f32.mrf.mxu0
    %v2361 = vadd.f32 %v2314, %v2360
    %v2362 = vpop.f32.mrf.mxu0
    %v2363 = vadd.f32 %v2318, %v2362
    %v2364 = vpop.f32.mrf.mxu0
    %v2365 = vpop.f32.mrf.mxu0
    %2366 = vdwg.mxu0
    %2367 = vmatprep.subr.bf16.mxu0 0
    %2368 = vmatpush1.bf16.msra.mxu0 %v2286
    %2369 = vmatprep.subr.bf16.mxu0 0
    %2370 = vmatpush1.bf16.msra.mxu0 %v2283
    %2371 = vmatprep.subr.bf16.mxu0 0
    %2372 = vmatpush1.bf16.msra.mxu0 %v2280
    %2373 = vmatprep.subr.bf16.mxu0 0
    %2374 = vmatpush1.bf16.msra.mxu0 %v2277
    %2375 = vmatprep.subr.bf16.mxu0 0
    %2376 = vmatpush1.bf16.msra.mxu0 %v2274
    %2377 = vmatprep.subr.bf16.mxu0 0
    %2378 = vmatpush1.bf16.msra.mxu0 %v2271
    %2379 = vmatprep.subr.bf16.mxu0 0
    %2380 = vmatpush1.bf16.msra.mxu0 %v2268
    %2381 = vmatprep.subr.bf16.mxu0 0
    %2382 = vmatpush1.bf16.msra.mxu0 %v2265
    %2383 = vmatprep.subr.bf16.mxu0 0
    %2384 = vmatpush2.bf16.msra.mxu0 0
    %2385 = vmatprep.subr.bf16.mxu0 0
    %2386 = vmatpush2.bf16.msra.mxu0 0
    %2387 = vmatprep.subr.bf16.mxu0 0
    %2388 = vmatpush2.bf16.msra.mxu0 0
    %2389 = vmatprep.subr.bf16.mxu0 0
    %2390 = vmatpush2.bf16.msra.mxu0 0
    %2391 = vmatprep.subr.bf16.mxu0 0
    %2392 = vmatpush2.bf16.msra.mxu0 0
    %2393 = vmatprep.subr.bf16.mxu0 0
    %2394 = vmatpush2.bf16.msra.mxu0 0
    %2395 = vmatprep.subr.bf16.mxu0 0
    %2396 = vmatpush2.bf16.msra.mxu0 0
    %2397 = vmatprep.subr.bf16.mxu0 0
    %2398 = vmatpush2.bf16.msra.mxu0 0
    %2399 = vmatprep.mubr.bf16.mxu0 0
    %2400 = vmatmul.mubr.bf16.gmra.mxu0 %v2150
    %v2401 = vpop.f32.mrf.mxu0
    %v2402 = vadd.f32 %v2322, %v2401
    %v2403 = vpop.f32.mrf.mxu0
    %v2404 = vpop.f32.mrf.mxu0
    %v2405 = vpop.f32.mrf.mxu0
    %2406 = vdwg.mxu0
    %v2407 = vtanh.pop %v2361
    %v2408 = vsub.f32 %v2361, %v2407
    %v2409 = vlaneseq
    %v2410 = vshrl.u32 %v2409, 7
    %v2411 = vsub.s32 6, %v2410
    %v2412 = vrot.slane %v62, %v2411
    %v2414 = vmul.f32 %v2408, %v2412
    %vm2415 = vcmask 516096
    %v2416 = vsel %vm2415, %v2414, 0.0
    %2417 = vadd.xlane.f32.xlu0 %v2416
    %v2418 = vpop.xlane.xlu0 %2417
    %v2419 = vlaneseq
    %v2420 = vshrl.u32 %v2419, 7
    %v2421 = vsub.s32 7, %v2420
    %v2422 = vrot.slane %v62, %v2421
    %v2424 = vadd.f32 %v2418, %v2422
    %v2425 = vsub.f32 0.0, %v2424
    %v2426 = vmul.f32 %v2425, 1.442695
    %v2427 = vpow.pop %v2426
    %v2428 = vadd.f32 %v2427, 1.0
    %v2429 = vrcp.pop %v2428
    %v2430 = vmul.f32 1.0, %v2429
    %vm2431 = vcmp.gt.f32.partialorder %v2363, 20.0
    %vm2432 = vcmp.gt.f32.partialorder %v2402, 20.0
    %v2433 = vmin.f32 %v2363, 20.0
    %v2434 = vmin.f32 %v2402, 20.0
    %v2435 = vmul.f32 %v2433, 1.442695
    %v2436 = vpow.pop %v2435
    %v2437 = vmul.f32 %v2434, 1.442695
    %v2438 = vpow.pop %v2437
    %v2439 = vadd.f32 %v2436, 1.0
    %v2440 = vlog2.pop %v2439
    %v2441 = vmul.f32 %v2440, 0.6931472
    %v2442 = vmul.f32 -0.5, %v2436
    %v2443 = vadd.f32 %v2442, 1.0
    %v2444 = vmul.f32 %v2443, %v2436
    %v2445 = vand.u32 2147483647, %v2436
    %vm2446 = vcmp.lt.f32.partialorder %v2445, 0.0004427343
    %v2447 = vsel %vm2446, %v2444, %v2441
    %v2448 = vadd.f32 %v2438, 1.0
    %v2449 = vlog2.pop %v2448
    %v2450 = vmul.f32 %v2449, 0.6931472
    %v2451 = vmul.f32 -0.5, %v2438
    %v2452 = vadd.f32 %v2451, 1.0
    %v2453 = vmul.f32 %v2452, %v2438
    %v2454 = vand.u32 2147483647, %v2438
    %vm2455 = vcmp.lt.f32.partialorder %v2454, 0.0004427343
    %v2456 = vsel %vm2455, %v2453, %v2450
    %v2457 = vsel %vm2431, %v2363, %v2447
    %v2458 = vsel %vm2432, %v2402, %v2456
    %v2459 = vpack.c.bf16 %v2457, %v2457
    %v2460 = vpack.c.bf16 %v2458, %v2458
    %v2461 = vld [vmem:[#allocation4 + $0x40] sm:$0xf]
    %v2462 = vld [vmem:[#allocation4 + $0x44] sm:$0xf]
    %v2463 = vld [vmem:[#allocation4 + $0x48] sm:$0xf]
    %v2464 = vld [vmem:[#allocation4 + $0x4c] sm:$0xf]
    %v2465 = vld [vmem:[#allocation4 + $0x50] sm:$0xf]
    %v2466 = vld [vmem:[#allocation4 + $0x54] sm:$0xf]
    %v2467 = vld [vmem:[#allocation4 + $0x58] sm:$0xf]
    %v2468 = vld [vmem:[#allocation4 + $0x5c] sm:$0xf]
    %v2469 = vld [vmem:[#allocation4 + $0x60] sm:$0xf]
    %v2470 = vld [vmem:[#allocation4 + $0x64] sm:$0xf]
    %v2471 = vld [vmem:[#allocation4 + $0x68] sm:$0xf]
    %v2472 = vld [vmem:[#allocation4 + $0x6c] sm:$0xf]
    %v2473 = vld [vmem:[#allocation4 + $0x70] sm:$0xf]
    %v2474 = vld [vmem:[#allocation4 + $0x74] sm:$0xf]
    %v2475 = vld [vmem:[#allocation4 + $0x78] sm:$0xf]
    %v2476 = vld [vmem:[#allocation4 + $0x7c] sm:$0xf]
    %v2477 = vld [vmem:[#allocation4 + $0x80] sm:$0xf]
    %v2478 = vld [vmem:[#allocation4 + $0x84] sm:$0xf]
    %v2479 = vld [vmem:[#allocation4 + $0x88] sm:$0xf]
    %v2480 = vld [vmem:[#allocation4 + $0x8c] sm:$0xf]
    %v2481 = vld [vmem:[#allocation4 + $0x90] sm:$0xf]
    %v2482 = vld [vmem:[#allocation4 + $0x94] sm:$0xf]
    %v2483 = vld [vmem:[#allocation4 + $0x98] sm:$0xf]
    %v2484 = vld [vmem:[#allocation4 + $0x9c] sm:$0xf]
    %v2485 = vld [vmem:[#allocation4 + $0xa0] sm:$0xf]
    %v2486 = vld [vmem:[#allocation4 + $0xa4] sm:$0xf]
    %v2487 = vld [vmem:[#allocation4 + $0xa8] sm:$0xf]
    %v2488 = vld [vmem:[#allocation4 + $0xac] sm:$0xf]
    %v2489 = vld [vmem:[#allocation4 + $0xb0] sm:$0xf]
    %v2490 = vld [vmem:[#allocation4 + $0xb4] sm:$0xf]
    %v2491 = vld [vmem:[#allocation4 + $0xb8] sm:$0xf]
    %v2492 = vld [vmem:[#allocation4 + $0xbc] sm:$0xf]
    %v2525 = vunpack.c.l.b16 %v2461
    %v2526 = vunpack.c.l.b16 %v2462
    %v2527 = vunpack.c.l.b16 %v2463
    %v2528 = vunpack.c.l.b16 %v2464
    %v2529 = vunpack.c.l.b16 %v2465
    %v2530 = vunpack.c.l.b16 %v2466
    %v2531 = vunpack.c.l.b16 %v2467
    %v2532 = vunpack.c.l.b16 %v2468
    %v2533 = vunpack.c.l.b16 %v2469
    %v2534 = vunpack.c.l.b16 %v2470
    %v2535 = vunpack.c.l.b16 %v2471
    %v2536 = vunpack.c.l.b16 %v2472
    %v2537 = vunpack.c.l.b16 %v2473
    %v2538 = vunpack.c.l.b16 %v2474
    %v2539 = vunpack.c.l.b16 %v2475
    %v2540 = vunpack.c.l.b16 %v2476
    %v2541 = vunpack.c.l.b16 %v2477
    %v2542 = vunpack.c.l.b16 %v2478
    %v2543 = vunpack.c.l.b16 %v2479
    %v2544 = vunpack.c.l.b16 %v2480
    %v2545 = vunpack.c.l.b16 %v2481
    %v2546 = vunpack.c.l.b16 %v2482
    %v2547 = vunpack.c.l.b16 %v2483
    %v2548 = vunpack.c.l.b16 %v2484
    %v2549 = vunpack.c.l.b16 %v2485
    %v2550 = vunpack.c.l.b16 %v2486
    %v2551 = vunpack.c.l.b16 %v2487
    %v2552 = vunpack.c.l.b16 %v2488
    %v2553 = vunpack.c.l.b16 %v2489
    %v2554 = vunpack.c.l.b16 %v2490
    %v2555 = vunpack.c.l.b16 %v2491
    %v2556 = vunpack.c.l.b16 %v2492
    %v2557 = vpack.c.b16 %v2526, %v2525
    %v2558 = vpack.c.b16 %v2528, %v2527
    %v2559 = vpack.c.b16 %v2530, %v2529
    %v2560 = vpack.c.b16 %v2532, %v2531
    %v2561 = vpack.c.b16 %v2534, %v2533
    %v2562 = vpack.c.b16 %v2536, %v2535
    %v2563 = vpack.c.b16 %v2538, %v2537
    %v2564 = vpack.c.b16 %v2540, %v2539
    %v2565 = vpack.c.b16 %v2542, %v2541
    %v2566 = vpack.c.b16 %v2544, %v2543
    %v2567 = vpack.c.b16 %v2546, %v2545
    %v2568 = vpack.c.b16 %v2548, %v2547
    %v2569 = vpack.c.b16 %v2550, %v2549
    %v2570 = vpack.c.b16 %v2552, %v2551
    %v2571 = vpack.c.b16 %v2554, %v2553
    %v2572 = vpack.c.b16 %v2556, %v2555
    %v2589 = vlaneseq
    %v2590 = vshrl.u32 %v2589, 7
    %v2591 = vsub.s32 5, %v2590
    %v2592 = vrot.slane %v62, %v2591
    %2594 = vmatprep.subr.bf16.mxu0 0
    %2595 = vmatpush1.bf16.msra.mxu0 %v2564
    %2596 = vmatprep.subr.bf16.mxu0 0
    %2597 = vmatpush1.bf16.msra.mxu0 %v2563
    %2598 = vmatprep.subr.bf16.mxu0 0
    %2599 = vmatpush1.bf16.msra.mxu0 %v2562
    %2600 = vmatprep.subr.bf16.mxu0 0
    %2601 = vmatpush1.bf16.msra.mxu0 %v2561
    %2602 = vmatprep.subr.bf16.mxu0 0
    %2603 = vmatpush1.bf16.msra.mxu0 %v2560
    %2604 = vmatprep.subr.bf16.mxu0 0
    %2605 = vmatpush1.bf16.msra.mxu0 %v2559
    %2606 = vmatprep.subr.bf16.mxu0 0
    %2607 = vmatpush1.bf16.msra.mxu0 %v2558
    %2608 = vmatprep.subr.bf16.mxu0 0
    %2609 = vmatpush1.bf16.msra.mxu0 %v2557
    %2610 = vmatprep.subr.bf16.mxu0 0
    %2611 = vmatpush2.bf16.msra.mxu0 %v2572
    %2612 = vmatprep.subr.bf16.mxu0 0
    %2613 = vmatpush2.bf16.msra.mxu0 %v2571
    %2614 = vmatprep.subr.bf16.mxu0 0
    %2615 = vmatpush2.bf16.msra.mxu0 %v2570
    %2616 = vmatprep.subr.bf16.mxu0 0
    %2617 = vmatpush2.bf16.msra.mxu0 %v2569
    %2618 = vmatprep.subr.bf16.mxu0 0
    %2619 = vmatpush2.bf16.msra.mxu0 %v2568
    %2620 = vmatprep.subr.bf16.mxu0 0
    %2621 = vmatpush2.bf16.msra.mxu0 %v2567
    %2622 = vmatprep.subr.bf16.mxu0 0
    %2623 = vmatpush2.bf16.msra.mxu0 %v2566
    %2624 = vmatprep.subr.bf16.mxu0 0
    %2625 = vmatpush2.bf16.msra.mxu0 %v2565
    %2626 = vmatprep.mubr.bf16.mxu0 %v2460
    %2627 = vmatmul.mubr.bf16.gmra.mxu0 %v2459
    %v2628 = vpop.f32.mrf.mxu0
    %v2629 = vadd.f32 %v2592, %v2628
    %v2630 = vpop.f32.mrf.mxu0
    %v2631 = vpop.f32.mrf.mxu0
    %v2632 = vpop.f32.mrf.mxu0
    %2633 = vdwg.mxu0
    %v2634 = vlaneseq
    %v2635 = vand.u32 %v2634, 127
    %vm2636 = vcmp.eq.s32.totalorder %v2635, 100
    %2638 = vset.pattern.permute.xlu0 0
    %2639 = vperm.xlu0 %2638, %v2430
    %v2640 = vpop.permute.xlu0 %2639
    %v2642 = vsel %vm2636, %v2640, %v2629
    %2643 = vst [vmem:[%s5] sm:$0x1] %v2642
    // Predicated region
    $region34: #{energy_latency_forward.1} parent=1 // pred_check
      _
    $region35: #{energy_latency_forward.1} parent=1 // pred_check_branch
      %2645 = sbr.rel (0) target = $region37
    $region36: #{energy_latency_forward.1} parent=1 // pred_region
      _
    $region37: #{energy_latency_forward.1} parent=1 // pred_fallthru
      _
    // Predicated region
    $region38: #{energy_latency_forward.1} parent=1 // pred_check
      _
    $region39: #{energy_latency_forward.1} parent=1 // pred_check_branch
      %2647 = sbr.rel (0) target = $region41
    $region40: #{energy_latency_forward.1} parent=1 // pred_region
      _
    $region41: #{energy_latency_forward.1} parent=1 // pred_fallthru
      _
    %2648 = vsyncpa [#allocation3], 1
    %2649 = vsyncpa [#allocation5], 1

</llo_original>
